<compile_context>
chip_gen: v6e
topology: v6e:2x2x1
jax: 0.10.0
libtpu: 0.0.40
codegen_flags: <defaults>
</compile_context>

<pallas_src>
import functools

import jax
import jax.numpy as jnp
from jax.experimental import pallas as pl
from jax.experimental.pallas import tpu as pltpu


def _attention_kernel(x_ref, mems_ref, wq_ref, wk_ref, wv_ref, wo_ref, bo_ref,
                      sel_ref, o_ref, *, heads, J):
    TN, dim = x_ref.shape
    HD = wq_ref.shape[1]                 # inner_dim = heads * dim_head
    TNJ = TN * J

    x = x_ref[...]                       # (TN, dim)
    m2 = mems_ref[...]                   # (TN*J, dim), rows ordered (n, j)

    # --- projections (MXU), all lane-dense with HD on the lane axis ---
    # Wq already carries the softmax scale (folded in on the host).
    q = jnp.dot(x, wq_ref[...], preferred_element_type=jnp.float32)          # (TN, HD)
    k = jnp.dot(m2, wk_ref[...], preferred_element_type=jnp.float32)         # (TNJ, HD)
    v = jnp.dot(m2, wv_ref[...], preferred_element_type=jnp.float32)         # (TNJ, HD)

    k3 = k.reshape(TN, J, HD)
    v3 = v.reshape(TN, J, HD)

    # sim[n, j, h*D+d] = sum_d' q[n, h*D+d'] * k[n, j, h*D+d']   (replicated
    # over d within each head via the "same-head" selector -> per-lane softmax
    # over j == per-head softmax, everything stays HD-lane-dense).
    qk = (q[:, None, :] * k3).reshape(TNJ, HD)                    # VPU, lane-dense
    sim = jnp.dot(qk, sel_ref[...], preferred_element_type=jnp.float32)  # MXU seg-sum
    sim = sim.reshape(TN, J, HD)

    # softmax over the memory-slot axis j
    sim = sim - jnp.max(sim, axis=1, keepdims=True)
    p = jnp.exp(sim)
    attn = p * pl.reciprocal(jnp.sum(p, axis=1, keepdims=True), approx=False)

    # out[n, h*D+d] = sum_j attn[n, j, h] * v[n, j, h*D+d]
    out = jnp.sum(attn * v3, axis=1)                              # (TN, HD)

    # --- output projection (with bias) ---
    res = jnp.dot(out, wo_ref[...], preferred_element_type=jnp.float32) + bo_ref[...]
    o_ref[...] = res.astype(o_ref.dtype)


def attention_pallas(x, mems, wq_t, wkv_t, wo_t, bo, *, heads):
    """x: (b, m, i, dim); mems: (b, m, i, j, dim). Returns (b, m, i, dim)."""
    b, m, i, dim = x.shape
    J = mems.shape[3]
    HD = wq_t.shape[1]
    assert HD % heads == 0
    D = HD // heads
    scale = float(D) ** -0.5

    N = b * m * i
    x_flat = x.reshape(N, dim)
    mems_flat = mems.reshape(N * J, dim)        # pre-flattened: no in-kernel reshape
    bo2d = bo.reshape(1, dim)
    wq_s = (wq_t * scale).astype(jnp.float32)   # fold scale into the q projection
    wk_t = wkv_t[:, :HD]                        # pre-split fused kv projection
    wv_t = wkv_t[:, HD:]

    # "Same-head" selector (HD, HD): sel[p, p'] = 1 iff lanes p, p' belong to
    # the same head.  Precomputed once on the host, resident in VMEM.
    row_h = jnp.arange(HD, dtype=jnp.int32)[:, None] // D
    col_h = jnp.arange(HD, dtype=jnp.int32)[None, :] // D
    sel = (row_h == col_h).astype(jnp.float32)

    def _round_up(a, k):
        return (a + k - 1) // k * k

    # --- row tile: as large as a conservative VMEM budget allows (<= 256) ---
    # rough f32 bytes per query row resident in VMEM:
    #   double-buffered inputs/outputs + the main HD-wide intermediates.
    bytes_per_row = 4 * (2 * dim + 2 * J * dim + 2 * dim + 6 * J * HD + 2 * HD)
    vmem_budget = 24 * 1024 * 1024              # headroom under the 48 MiB limit
    tn_cap = max(8, (vmem_budget // max(bytes_per_row, 1)) // 8 * 8)
    TN = int(min(256, tn_cap, _round_up(N, 8)))
    Npad = _round_up(N, TN)
    if Npad != N:
        x_flat = jnp.pad(x_flat, ((0, Npad - N), (0, 0)))
        mems_flat = jnp.pad(mems_flat, ((0, (Npad - N) * J), (0, 0)))
    grid = (Npad // TN,)

    kernel = functools.partial(_attention_kernel, heads=heads, J=J)

    flops = (2 * Npad * dim * HD                 # q projection
             + 2 * Npad * J * dim * 2 * HD       # k, v projections
             + 2 * Npad * J * HD * HD            # head-selector contraction
             + 2 * Npad * J * HD * 2             # qk / attn*v elementwise
             + 2 * Npad * HD * dim)              # output projection
    bytes_accessed = 4 * (Npad * dim * 2 + Npad * J * dim
                          + 3 * dim * HD + HD * dim + dim + HD * HD)
    cost = pl.CostEstimate(flops=flops,
                           transcendentals=Npad * J * heads,
                           bytes_accessed=bytes_accessed)

    out_flat = pl.pallas_call(
        kernel,
        out_shape=jax.ShapeDtypeStruct((Npad, dim), x.dtype),
        grid=grid,
        in_specs=[
            pl.BlockSpec((TN, dim), lambda n: (n, 0)),        # x
            pl.BlockSpec((TN * J, dim), lambda n: (n, 0)),    # mems (flat, j inner)
            pl.BlockSpec((dim, HD), lambda n: (0, 0)),        # Wq^T (pre-scaled)
            pl.BlockSpec((dim, HD), lambda n: (0, 0)),        # Wk^T
            pl.BlockSpec((dim, HD), lambda n: (0, 0)),        # Wv^T
            pl.BlockSpec((HD, dim), lambda n: (0, 0)),        # Wo^T
            pl.BlockSpec((1, dim), lambda n: (0, 0)),         # bias
            pl.BlockSpec((HD, HD), lambda n: (0, 0)),         # same-head selector
        ],
        out_specs=pl.BlockSpec((TN, dim), lambda n: (n, 0)),
        compiler_params=pltpu.CompilerParams(
            dimension_semantics=("parallel",),
            vmem_limit_bytes=48 * 1024 * 1024),
        cost_estimate=cost,
    )(x_flat, mems_flat, wq_s, wk_t, wv_t, wo_t, bo2d, sel)

    return out_flat[:N].reshape(b, m, i, dim)


def attention_ref(x, mems, wq_t, wkv_t, wo_t, bo, *, heads):
    """Pure-JAX reference matching the PyTorch forward (mask=None)."""
    b, m, i, dim = x.shape
    j = mems.shape[3]
    HD = wq_t.shape[1]
    D = HD // heads
    scale = float(D) ** -0.5

    q = x @ wq_t                                    # (b,m,i,HD)
    kv = mems @ wkv_t                               # (b,m,i,j,2HD)
    k, v = kv[..., :HD], kv[..., HD:]
    q = q.reshape(b, m, i, heads, D) * scale
    k = k.reshape(b, m, i, j, heads, D)
    v = v.reshape(b, m, i, j, heads, D)
    sim = jnp.einsum('bmihd,bmijhd->bmihj', q, k)
    attn = jax.nn.softmax(sim, axis=-1)
    out = jnp.einsum('bmihj,bmijhd->bmihd', attn, v)
    out = out.reshape(b, m, i, HD)
    return out @ wo_t + bo


if __name__ == "__main__":
    # Small shapes consistent with the module's forward:
    #   x:    (b, m, i, dim)        -- queries
    #   mems: (b, m, i, j, dim)     -- per-query memories
    b, m, i, j = 2, 2, 8, 8
    dim, heads, dim_head = 32, 4, 8
    inner = heads * dim_head

    key = jax.random.PRNGKey(0)
    kx, km, k1, k2, k3, k4 = jax.random.split(key, 6)

    x = jax.random.normal(kx, (b, m, i, dim), dtype=jnp.float32)
    mems = jax.random.normal(km, (b, m, i, j, dim), dtype=jnp.float32)

    # PyTorch Linear weight is (out, in); we store the transposed (in, out).
    wq_t = 0.1 * jax.random.normal(k1, (dim, inner), dtype=jnp.float32)
    wkv_t = 0.1 * jax.random.normal(k2, (dim, 2 * inner), dtype=jnp.float32)
    wo_t = 0.1 * jax.random.normal(k3, (inner, dim), dtype=jnp.float32)
    bo = 0.01 * jax.random.normal(k4, (dim,), dtype=jnp.float32)

    out = attention_pallas(x, mems, wq_t, wkv_t, wo_t, bo, heads=heads)
    out = jax.block_until_ready(out)

    ref = attention_ref(x, mems, wq_t, wkv_t, wo_t, bo, heads=heads)
    assert out.shape == (b, m, i, dim)
    assert jnp.allclose(out, ref, atol=1e-4, rtol=1e-4), "mismatch vs reference"

    print("KERNEL_OK")
</pallas_src>

<mosaic_0001>
module attributes {stable_mosaic.version = 11 : i64} {
  func.func @_attention_kernel(%arg0: i32, %arg1: memref<32x32xf32, #tpu.memory_space<vmem>>, %arg2: memref<256x32xf32, #tpu.memory_space<vmem>>, %arg3: memref<32x32xf32, #tpu.memory_space<vmem>>, %arg4: memref<32x32xf32, #tpu.memory_space<vmem>>, %arg5: memref<32x32xf32, #tpu.memory_space<vmem>>, %arg6: memref<32x32xf32, #tpu.memory_space<vmem>>, %arg7: memref<1x32xf32, #tpu.memory_space<vmem>>, %arg8: memref<32x32xf32, #tpu.memory_space<vmem>>, %arg9: memref<32x32xf32, #tpu.memory_space<vmem>>) attributes {dimension_semantics = [#tpu.dimension_semantics<parallel>], iteration_bounds = array<i64: 1>, scalar_prefetch = 0 : i64, scratch_operands = 0 : i64, tpu.core_type = #tpu.core_type<tc>, window_params = [{transform_indices = @transform_0, window_bounds = array<i64: 32, 32>}, {transform_indices = @transform_1, window_bounds = array<i64: 256, 32>}, {pipeline_mode = #tpu.pipeline_mode<synchronous>, transform_indices = @transform_2, window_bounds = array<i64: 32, 32>}, {pipeline_mode = #tpu.pipeline_mode<synchronous>, transform_indices = @transform_3, window_bounds = array<i64: 32, 32>}, {pipeline_mode = #tpu.pipeline_mode<synchronous>, transform_indices = @transform_4, window_bounds = array<i64: 32, 32>}, {pipeline_mode = #tpu.pipeline_mode<synchronous>, transform_indices = @transform_5, window_bounds = array<i64: 32, 32>}, {pipeline_mode = #tpu.pipeline_mode<synchronous>, transform_indices = @transform_6, window_bounds = array<i64: 1, 32>}, {pipeline_mode = #tpu.pipeline_mode<synchronous>, transform_indices = @transform_7, window_bounds = array<i64: 32, 32>}, {transform_indices = @transform_8, window_bounds = array<i64: 32, 32>}]} {
    %c0 = arith.constant 0 : index
    %c0_0 = arith.constant 0 : index
    %0 = vector.load %arg1[%c0, %c0_0] : memref<32x32xf32, #tpu.memory_space<vmem>>, vector<32x32xf32>
    %c0_1 = arith.constant 0 : index
    %c0_2 = arith.constant 0 : index
    %1 = vector.load %arg2[%c0_1, %c0_2] : memref<256x32xf32, #tpu.memory_space<vmem>>, vector<256x32xf32>
    %c0_3 = arith.constant 0 : index
    %c0_4 = arith.constant 0 : index
    %2 = vector.load %arg3[%c0_3, %c0_4] : memref<32x32xf32, #tpu.memory_space<vmem>>, vector<32x32xf32>
    %cst = arith.constant dense<0.000000e+00> : vector<32x32xf32>
    %3 = tpu.matmul %0, %2, %cst {dimension_numbers = #tpu.dot_dimension_numbers<[1], [0], [0], [1], [0, 0, 1, 1], [], []>} : vector<32x32xf32>, vector<32x32xf32>, vector<32x32xf32> -> vector<32x32xf32>
    %c0_5 = arith.constant 0 : index
    %c0_6 = arith.constant 0 : index
    %4 = vector.load %arg4[%c0_5, %c0_6] : memref<32x32xf32, #tpu.memory_space<vmem>>, vector<32x32xf32>
    %cst_7 = arith.constant dense<0.000000e+00> : vector<256x32xf32>
    %5 = tpu.matmul %1, %4, %cst_7 {dimension_numbers = #tpu.dot_dimension_numbers<[1], [0], [0], [1], [0, 0, 1, 1], [], []>} : vector<256x32xf32>, vector<32x32xf32>, vector<256x32xf32> -> vector<256x32xf32>
    %c0_8 = arith.constant 0 : index
    %c0_9 = arith.constant 0 : index
    %6 = vector.load %arg5[%c0_8, %c0_9] : memref<32x32xf32, #tpu.memory_space<vmem>>, vector<32x32xf32>
    %cst_10 = arith.constant dense<0.000000e+00> : vector<256x32xf32>
    %7 = tpu.matmul %1, %6, %cst_10 {dimension_numbers = #tpu.dot_dimension_numbers<[1], [0], [0], [1], [0, 0, 1, 1], [], []>} : vector<256x32xf32>, vector<32x32xf32>, vector<256x32xf32> -> vector<256x32xf32>
    %8 = vector.shape_cast %5 : vector<256x32xf32> to vector<32x8x32xf32>
    %9 = vector.shape_cast %7 : vector<256x32xf32> to vector<32x8x32xf32>
    %10 = vector.shape_cast %3 : vector<32x32xf32> to vector<32x1x32xf32>
    %11 = vector.broadcast %10 : vector<32x1x32xf32> to vector<32x8x32xf32>
    %12 = arith.mulf %11, %8 : vector<32x8x32xf32>
    %13 = vector.shape_cast %12 : vector<32x8x32xf32> to vector<256x32xf32>
    %c0_11 = arith.constant 0 : index
    %c0_12 = arith.constant 0 : index
    %14 = vector.load %arg8[%c0_11, %c0_12] : memref<32x32xf32, #tpu.memory_space<vmem>>, vector<32x32xf32>
    %cst_13 = arith.constant dense<0.000000e+00> : vector<256x32xf32>
    %15 = tpu.matmul %13, %14, %cst_13 {dimension_numbers = #tpu.dot_dimension_numbers<[1], [0], [0], [1], [0, 0, 1, 1], [], []>} : vector<256x32xf32>, vector<32x32xf32>, vector<256x32xf32> -> vector<256x32xf32>
    %16 = vector.shape_cast %15 : vector<256x32xf32> to vector<32x8x32xf32>
    %cst_14 = arith.constant dense<0xFF800000> : vector<32x32xf32>
    %17 = vector.multi_reduction <maximumf>, %16, %cst_14 [1] : vector<32x8x32xf32> to vector<32x32xf32>
    %18 = vector.shape_cast %17 : vector<32x32xf32> to vector<32x1x32xf32>
    %19 = vector.broadcast %18 : vector<32x1x32xf32> to vector<32x8x32xf32>
    %20 = arith.subf %16, %19 : vector<32x8x32xf32>
    %21 = math.exp %20 : vector<32x8x32xf32>
    %cst_15 = arith.constant dense<0.000000e+00> : vector<32x32xf32>
    %22 = vector.multi_reduction <add>, %21, %cst_15 [1] : vector<32x8x32xf32> to vector<32x32xf32>
    %23 = vector.shape_cast %22 : vector<32x32xf32> to vector<32x1x32xf32>
    %24 = tpu.reciprocal %23 : vector<32x1x32xf32> -> vector<32x1x32xf32>
    %25 = vector.broadcast %24 : vector<32x1x32xf32> to vector<32x8x32xf32>
    %26 = arith.mulf %21, %25 : vector<32x8x32xf32>
    %27 = arith.mulf %26, %9 : vector<32x8x32xf32>
    %cst_16 = arith.constant dense<0.000000e+00> : vector<32x32xf32>
    %28 = vector.multi_reduction <add>, %27, %cst_16 [1] : vector<32x8x32xf32> to vector<32x32xf32>
    %c0_17 = arith.constant 0 : index
    %c0_18 = arith.constant 0 : index
    %29 = vector.load %arg6[%c0_17, %c0_18] : memref<32x32xf32, #tpu.memory_space<vmem>>, vector<32x32xf32>
    %cst_19 = arith.constant dense<0.000000e+00> : vector<32x32xf32>
    %30 = tpu.matmul %28, %29, %cst_19 {dimension_numbers = #tpu.dot_dimension_numbers<[1], [0], [0], [1], [0, 0, 1, 1], [], []>} : vector<32x32xf32>, vector<32x32xf32>, vector<32x32xf32> -> vector<32x32xf32>
    %c0_20 = arith.constant 0 : index
    %c0_21 = arith.constant 0 : index
    %31 = vector.load %arg7[%c0_20, %c0_21] : memref<1x32xf32, #tpu.memory_space<vmem>>, vector<1x32xf32>
    %32 = vector.broadcast %31 : vector<1x32xf32> to vector<32x32xf32>
    %33 = arith.addf %30, %32 : vector<32x32xf32>
    %c0_22 = arith.constant 0 : index
    %c0_23 = arith.constant 0 : index
    %34 = vector.load %arg9[%c0_22, %c0_23] : memref<32x32xf32, #tpu.memory_space<vmem>>, vector<32x32xf32>
    tpu.vector_store %arg9[%c0_22, %c0_23], %33 {strides = array<i32>} : memref<32x32xf32, #tpu.memory_space<vmem>>, vector<32x32xf32>,
    return
  }
  func.func @transform_0(%arg0: i32) -> (i32, i32) {
    %c0_i32 = arith.constant 0 : i32
    %c0_i32_0 = arith.constant 0 : i32
    return %arg0, %c0_i32 : i32, i32
  }
  func.func @transform_1(%arg0: i32) -> (i32, i32) {
    %c0_i32 = arith.constant 0 : i32
    %c0_i32_0 = arith.constant 0 : i32
    return %arg0, %c0_i32 : i32, i32
  }
  func.func @transform_2(%arg0: i32) -> (i32, i32) {
    %c0_i32 = arith.constant 0 : i32
    %c0_i32_0 = arith.constant 0 : i32
    %c0_i32_1 = arith.constant 0 : i32
    return %c0_i32, %c0_i32_0 : i32, i32
  }
  func.func @transform_3(%arg0: i32) -> (i32, i32) {
    %c0_i32 = arith.constant 0 : i32
    %c0_i32_0 = arith.constant 0 : i32
    %c0_i32_1 = arith.constant 0 : i32
    return %c0_i32, %c0_i32_0 : i32, i32
  }
  func.func @transform_4(%arg0: i32) -> (i32, i32) {
    %c0_i32 = arith.constant 0 : i32
    %c0_i32_0 = arith.constant 0 : i32
    %c0_i32_1 = arith.constant 0 : i32
    return %c0_i32, %c0_i32_0 : i32, i32
  }
  func.func @transform_5(%arg0: i32) -> (i32, i32) {
    %c0_i32 = arith.constant 0 : i32
    %c0_i32_0 = arith.constant 0 : i32
    %c0_i32_1 = arith.constant 0 : i32
    return %c0_i32, %c0_i32_0 : i32, i32
  }
  func.func @transform_6(%arg0: i32) -> (i32, i32) {
    %c0_i32 = arith.constant 0 : i32
    %c0_i32_0 = arith.constant 0 : i32
    %c0_i32_1 = arith.constant 0 : i32
    return %c0_i32, %c0_i32_0 : i32, i32
  }
  func.func @transform_7(%arg0: i32) -> (i32, i32) {
    %c0_i32 = arith.constant 0 : i32
    %c0_i32_0 = arith.constant 0 : i32
    %c0_i32_1 = arith.constant 0 : i32
    return %c0_i32, %c0_i32_0 : i32, i32
  }
  func.func @transform_8(%arg0: i32) -> (i32, i32) {
    %c0_i32 = arith.constant 0 : i32
    %c0_i32_0 = arith.constant 0 : i32
    return %arg0, %c0_i32 : i32, i32
  }
}

</mosaic_0001>

<llo_original>
// kernel: tpu_custom_call.1
$region0: #{tpu_custom_call.1}
  #allocation0 [shape = 'u32[]', space=smem, size = 0x4, offset = 0x4, fixed_abs, tag = 'smem constant byte address 0x4 - core index']
  #allocation1 [shape = 'u32[144,128]{1,0:T(1,128)}', space=vmem, size = 0x12000, scoped, tag = 'internal scratch']
  %s0 = inlined_call_operand.vmem [shape: f32[32,32], index: 0, kind: input, shape index: {}]
  %s1 = inlined_call_operand.vmem [shape: f32[256,32], index: 1, kind: input, shape index: {}]
  %s2 = inlined_call_operand.vmem [shape: f32[32,32], index: 2, kind: input, shape index: {}]
  %s3 = inlined_call_operand.vmem [shape: f32[32,32], index: 3, kind: input, shape index: {}]
  %s4 = inlined_call_operand.vmem [shape: f32[32,32], index: 4, kind: input, shape index: {}]
  %s5 = inlined_call_operand.vmem [shape: f32[32,32], index: 5, kind: input, shape index: {}]
  %s6 = inlined_call_operand.vmem [shape: f32[1,32], index: 6, kind: input, shape index: {}]
  %s7 = inlined_call_operand.vmem [shape: f32[32,32], index: 7, kind: input, shape index: {}]
  %s8 = inlined_call_operand.hbm [shape: f32[32,32], index: 8, kind: output, shape index: {}]
  %s9 = sld [smem:[#allocation0]]
  $region42: #{tpu_custom_call.1} parent=0
    _
  %s11 = ssub.s32 1, %s9
  %s12 = scalar_select 0, %s11, %s9
  $region1: #{tpu_custom_call.1} parent=0
    #allocation2 [shape = 'u8[16384]{0}', space=vmem, size = 0x4000, scoped, tag = 'output window, operand 0, single buffered']
    #allocation3 [shape = 's32[1]{0}', space=sflag, size = 0x4, scoped, tag = 'scoped memory for tpu_custom_call.1']
    %13 = vsyncpa [#allocation3], 0
    // Predicated region
    $region2: #{tpu_custom_call.1} parent=1 // pred_check
      _
    $region3: #{tpu_custom_call.1} parent=1 // pred_check_branch
      %15 = sbr.rel (0) target = $region5
    $region4: #{tpu_custom_call.1} parent=1 // pred_region
      _
    $region5: #{tpu_custom_call.1} parent=1 // pred_fallthru
      _
    // Predicated region
    $region6: #{tpu_custom_call.1} parent=1 // pred_check
      _
    $region7: #{tpu_custom_call.1} parent=1 // pred_check_branch
      %17 = sbr.rel (0) target = $region9
    $region8: #{tpu_custom_call.1} parent=1 // pred_region
      _
    $region9: #{tpu_custom_call.1} parent=1 // pred_fallthru
      _
    // Predicated region
    $region10: #{tpu_custom_call.1} parent=1 // pred_check
      _
    $region11: #{tpu_custom_call.1} parent=1 // pred_check_branch
      %19 = sbr.rel (0) target = $region13
    $region12: #{tpu_custom_call.1} parent=1 // pred_region
      _
    $region13: #{tpu_custom_call.1} parent=1 // pred_fallthru
      _
    // Predicated region
    $region14: #{tpu_custom_call.1} parent=1 // pred_check
      _
    $region15: #{tpu_custom_call.1} parent=1 // pred_check_branch
      %21 = sbr.rel (0) target = $region17
    $region16: #{tpu_custom_call.1} parent=1 // pred_region
      _
    $region17: #{tpu_custom_call.1} parent=1 // pred_fallthru
      _
    // Predicated region
    $region18: #{tpu_custom_call.1} parent=1 // pred_check
      _
    $region19: #{tpu_custom_call.1} parent=1 // pred_check_branch
      %23 = sbr.rel (0) target = $region21
    $region20: #{tpu_custom_call.1} parent=1 // pred_region
      _
    $region21: #{tpu_custom_call.1} parent=1 // pred_fallthru
      _
    // Predicated region
    $region22: #{tpu_custom_call.1} parent=1 // pred_check
      _
    $region23: #{tpu_custom_call.1} parent=1 // pred_check_branch
      %25 = sbr.rel (0) target = $region25
    $region24: #{tpu_custom_call.1} parent=1 // pred_region
      _
    $region25: #{tpu_custom_call.1} parent=1 // pred_fallthru
      _
    // Predicated region
    $region26: #{tpu_custom_call.1} parent=1 // pred_check
      _
    $region27: #{tpu_custom_call.1} parent=1 // pred_check_branch
      %27 = sbr.rel (0) target = $region29
    $region28: #{tpu_custom_call.1} parent=1 // pred_region
      _
    $region29: #{tpu_custom_call.1} parent=1 // pred_fallthru
      _
    // Predicated region
    $region30: #{tpu_custom_call.1} parent=1 // pred_check
      _
    $region31: #{tpu_custom_call.1} parent=1 // pred_check_branch
      %29 = sbr.rel (0) target = $region33
    $region32: #{tpu_custom_call.1} parent=1 // pred_region
      _
    $region33: #{tpu_custom_call.1} parent=1 // pred_fallthru
      _
    %v30 = vld [vmem:[%s0] sm:$0xff]
    %v31 = vld [vmem:[%s0 + $0x8] sm:$0xff]
    %v32 = vld [vmem:[%s0 + $0x10] sm:$0xff]
    %v33 = vld [vmem:[%s0 + $0x18] sm:$0xff]
    %v34 = vld [vmem:[%s1] sm:$0xff]
    %v35 = vld [vmem:[%s1 + $0x8] sm:$0xff]
    %v36 = vld [vmem:[%s1 + $0x10] sm:$0xff]
    %v37 = vld [vmem:[%s1 + $0x18] sm:$0xff]
    %v38 = vld [vmem:[%s1 + $0x20] sm:$0xff]
    %v39 = vld [vmem:[%s1 + $0x28] sm:$0xff]
    %v40 = vld [vmem:[%s1 + $0x30] sm:$0xff]
    %v41 = vld [vmem:[%s1 + $0x38] sm:$0xff]
    %v42 = vld [vmem:[%s1 + $0x40] sm:$0xff]
    %v43 = vld [vmem:[%s1 + $0x48] sm:$0xff]
    %v44 = vld [vmem:[%s1 + $0x50] sm:$0xff]
    %v45 = vld [vmem:[%s1 + $0x58] sm:$0xff]
    %v46 = vld [vmem:[%s1 + $0x60] sm:$0xff]
    %v47 = vld [vmem:[%s1 + $0x68] sm:$0xff]
    %v48 = vld [vmem:[%s1 + $0x70] sm:$0xff]
    %v49 = vld [vmem:[%s1 + $0x78] sm:$0xff]
    %v50 = vld [vmem:[%s1 + $0x80] sm:$0xff]
    %v51 = vld [vmem:[%s1 + $0x88] sm:$0xff]
    %v52 = vld [vmem:[%s1 + $0x90] sm:$0xff]
    %v53 = vld [vmem:[%s1 + $0x98] sm:$0xff]
    %v54 = vld [vmem:[%s1 + $0xa0] sm:$0xff]
    %v55 = vld [vmem:[%s1 + $0xa8] sm:$0xff]
    %v56 = vld [vmem:[%s1 + $0xb0] sm:$0xff]
    %v57 = vld [vmem:[%s1 + $0xb8] sm:$0xff]
    %v58 = vld [vmem:[%s1 + $0xc0] sm:$0xff]
    %v59 = vld [vmem:[%s1 + $0xc8] sm:$0xff]
    %v60 = vld [vmem:[%s1 + $0xd0] sm:$0xff]
    %v61 = vld [vmem:[%s1 + $0xd8] sm:$0xff]
    %v62 = vld [vmem:[%s1 + $0xe0] sm:$0xff]
    %v63 = vld [vmem:[%s1 + $0xe8] sm:$0xff]
    %v64 = vld [vmem:[%s1 + $0xf0] sm:$0xff]
    %v65 = vld [vmem:[%s1 + $0xf8] sm:$0xff]
    %v66 = vld [vmem:[%s2] sm:$0xff]
    %v67 = vld [vmem:[%s2 + $0x8] sm:$0xff]
    %v68 = vld [vmem:[%s2 + $0x10] sm:$0xff]
    %v69 = vld [vmem:[%s2 + $0x18] sm:$0xff]
    %vm70 = vcmask 261120
    %v72 = vsel %vm70, %v30, 0
    %v75 = vsel %vm70, %v31, 0
    %v78 = vsel %vm70, %v32, 0
    %v81 = vsel %vm70, %v33, 0
    %83 = vmatprep.subr.mxu0 0.0
    %84 = vmatpush1.msra.mxu0 0.0
    %85 = vmatprep.subr.mxu0 0.0
    %86 = vmatpush1.msra.mxu0 0.0
    %87 = vmatprep.subr.mxu0 0.0
    %88 = vmatpush1.msra.mxu0 0.0
    %89 = vmatprep.subr.mxu0 0.0
    %90 = vmatpush1.msra.mxu0 0.0
    %91 = vmatprep.subr.mxu0 0.0
    %92 = vmatpush1.msra.mxu0 0.0
    %93 = vmatprep.subr.mxu0 0.0
    %94 = vmatpush1.msra.mxu0 0.0
    %95 = vmatprep.subr.mxu0 0.0
    %96 = vmatpush1.msra.mxu0 0.0
    %97 = vmatprep.subr.mxu0 0.0
    %98 = vmatpush1.msra.mxu0 0.0
    %99 = vmatprep.subr.mxu0 0.0
    %100 = vmatpush1.msra.mxu0 0.0
    %101 = vmatprep.subr.mxu0 0.0
    %102 = vmatpush1.msra.mxu0 0.0
    %103 = vmatprep.subr.mxu0 0.0
    %104 = vmatpush1.msra.mxu0 0.0
    %105 = vmatprep.subr.mxu0 0.0
    %106 = vmatpush1.msra.mxu0 0.0
    %107 = vmatprep.subr.mxu0 0.0
    %108 = vmatpush1.msra.mxu0 %v69
    %109 = vmatprep.subr.mxu0 0.0
    %110 = vmatpush1.msra.mxu0 %v68
    %111 = vmatprep.subr.mxu0 0.0
    %112 = vmatpush1.msra.mxu0 %v67
    %113 = vmatprep.subr.mxu0 0.0
    %114 = vmatpush1.msra.mxu0 %v66
    %115 = vmatprep.subr.mxu0 0.0
    %116 = vmatpush2.msra.mxu0 0.0
    %117 = vmatprep.subr.mxu0 0.0
    %118 = vmatpush2.msra.mxu0 0.0
    %119 = vmatprep.subr.mxu0 0.0
    %120 = vmatpush2.msra.mxu0 0.0
    %121 = vmatprep.subr.mxu0 0.0
    %122 = vmatpush2.msra.mxu0 0.0
    %123 = vmatprep.subr.mxu0 0.0
    %124 = vmatpush2.msra.mxu0 0.0
    %125 = vmatprep.subr.mxu0 0.0
    %126 = vmatpush2.msra.mxu0 0.0
    %127 = vmatprep.subr.mxu0 0.0
    %128 = vmatpush2.msra.mxu0 0.0
    %129 = vmatprep.subr.mxu0 0.0
    %130 = vmatpush2.msra.mxu0 0.0
    %131 = vmatprep.subr.mxu0 0.0
    %132 = vmatpush2.msra.mxu0 0.0
    %133 = vmatprep.subr.mxu0 0.0
    %134 = vmatpush2.msra.mxu0 0.0
    %135 = vmatprep.subr.mxu0 0.0
    %136 = vmatpush2.msra.mxu0 0.0
    %137 = vmatprep.subr.mxu0 0.0
    %138 = vmatpush2.msra.mxu0 0.0
    %139 = vmatprep.subr.mxu0 0.0
    %140 = vmatpush2.msra.mxu0 0.0
    %141 = vmatprep.subr.mxu0 0.0
    %142 = vmatpush2.msra.mxu0 0.0
    %143 = vmatprep.subr.mxu0 0.0
    %144 = vmatpush2.msra.mxu0 0.0
    %145 = vmatprep.subr.mxu0 0.0
    %146 = vmatpush2.msra.mxu0 0.0
    %147 = vmatprep.mubr.f32.mxu0 0.0
    %148 = vmatmul.mubr.f32.gmra.mxu0 %v72
    %v149 = vpop.f32.mrf.mxu0
    %v150 = vadd.f32 0.0, %v149
    %v151 = vpop.f32.mrf.mxu0
    %152 = vmatprep.mubr.f32.mxu0 0.0
    %153 = vmatmul.mubr.f32.gmra.mxu0 %v75
    %v154 = vpop.f32.mrf.mxu0
    %v155 = vadd.f32 0.0, %v154
    %v156 = vpop.f32.mrf.mxu0
    %157 = vmatprep.mubr.f32.mxu0 0.0
    %158 = vmatmul.mubr.f32.gmra.mxu0 %v78
    %v159 = vpop.f32.mrf.mxu0
    %v160 = vadd.f32 0.0, %v159
    %v161 = vpop.f32.mrf.mxu0
    %162 = vmatprep.mubr.f32.mxu0 0.0
    %163 = vmatmul.mubr.f32.gmra.mxu0 %v81
    %v164 = vpop.f32.mrf.mxu0
    %v165 = vadd.f32 0.0, %v164
    %v166 = vpop.f32.mrf.mxu0
    %167 = vdwg.mxu0
    %v168 = vld [vmem:[%s3] sm:$0xff]
    %v169 = vld [vmem:[%s3 + $0x8] sm:$0xff]
    %v170 = vld [vmem:[%s3 + $0x10] sm:$0xff]
    %v171 = vld [vmem:[%s3 + $0x18] sm:$0xff]
    %v173 = vsel %vm70, %v34, 0
    %v176 = vsel %vm70, %v35, 0
    %v179 = vsel %vm70, %v36, 0
    %v182 = vsel %vm70, %v37, 0
    %v185 = vsel %vm70, %v38, 0
    %v188 = vsel %vm70, %v39, 0
    %v191 = vsel %vm70, %v40, 0
    %v194 = vsel %vm70, %v41, 0
    %v197 = vsel %vm70, %v42, 0
    %v200 = vsel %vm70, %v43, 0
    %v203 = vsel %vm70, %v44, 0
    %v206 = vsel %vm70, %v45, 0
    %v209 = vsel %vm70, %v46, 0
    %v212 = vsel %vm70, %v47, 0
    %v215 = vsel %vm70, %v48, 0
    %v218 = vsel %vm70, %v49, 0
    %v221 = vsel %vm70, %v50, 0
    %v224 = vsel %vm70, %v51, 0
    %v227 = vsel %vm70, %v52, 0
    %v230 = vsel %vm70, %v53, 0
    %v233 = vsel %vm70, %v54, 0
    %v236 = vsel %vm70, %v55, 0
    %v239 = vsel %vm70, %v56, 0
    %v242 = vsel %vm70, %v57, 0
    %v245 = vsel %vm70, %v58, 0
    %v248 = vsel %vm70, %v59, 0
    %v251 = vsel %vm70, %v60, 0
    %v254 = vsel %vm70, %v61, 0
    %v257 = vsel %vm70, %v62, 0
    %v260 = vsel %vm70, %v63, 0
    %v263 = vsel %vm70, %v64, 0
    %v266 = vsel %vm70, %v65, 0
    %268 = vmatprep.subr.mxu0 0.0
    %269 = vmatpush1.msra.mxu0 0.0
    %270 = vmatprep.subr.mxu0 0.0
    %271 = vmatpush1.msra.mxu0 0.0
    %272 = vmatprep.subr.mxu0 0.0
    %273 = vmatpush1.msra.mxu0 0.0
    %274 = vmatprep.subr.mxu0 0.0
    %275 = vmatpush1.msra.mxu0 0.0
    %276 = vmatprep.subr.mxu0 0.0
    %277 = vmatpush1.msra.mxu0 0.0
    %278 = vmatprep.subr.mxu0 0.0
    %279 = vmatpush1.msra.mxu0 0.0
    %280 = vmatprep.subr.mxu0 0.0
    %281 = vmatpush1.msra.mxu0 0.0
    %282 = vmatprep.subr.mxu0 0.0
    %283 = vmatpush1.msra.mxu0 0.0
    %284 = vmatprep.subr.mxu0 0.0
    %285 = vmatpush1.msra.mxu0 0.0
    %286 = vmatprep.subr.mxu0 0.0
    %287 = vmatpush1.msra.mxu0 0.0
    %288 = vmatprep.subr.mxu0 0.0
    %289 = vmatpush1.msra.mxu0 0.0
    %290 = vmatprep.subr.mxu0 0.0
    %291 = vmatpush1.msra.mxu0 0.0
    %292 = vmatprep.subr.mxu0 0.0
    %293 = vmatpush1.msra.mxu0 %v171
    %294 = vmatprep.subr.mxu0 0.0
    %295 = vmatpush1.msra.mxu0 %v170
    %296 = vmatprep.subr.mxu0 0.0
    %297 = vmatpush1.msra.mxu0 %v169
    %298 = vmatprep.subr.mxu0 0.0
    %299 = vmatpush1.msra.mxu0 %v168
    %300 = vmatprep.subr.mxu0 0.0
    %301 = vmatpush2.msra.mxu0 0.0
    %302 = vmatprep.subr.mxu0 0.0
    %303 = vmatpush2.msra.mxu0 0.0
    %304 = vmatprep.subr.mxu0 0.0
    %305 = vmatpush2.msra.mxu0 0.0
    %306 = vmatprep.subr.mxu0 0.0
    %307 = vmatpush2.msra.mxu0 0.0
    %308 = vmatprep.subr.mxu0 0.0
    %309 = vmatpush2.msra.mxu0 0.0
    %310 = vmatprep.subr.mxu0 0.0
    %311 = vmatpush2.msra.mxu0 0.0
    %312 = vmatprep.subr.mxu0 0.0
    %313 = vmatpush2.msra.mxu0 0.0
    %314 = vmatprep.subr.mxu0 0.0
    %315 = vmatpush2.msra.mxu0 0.0
    %316 = vmatprep.subr.mxu0 0.0
    %317 = vmatpush2.msra.mxu0 0.0
    %318 = vmatprep.subr.mxu0 0.0
    %319 = vmatpush2.msra.mxu0 0.0
    %320 = vmatprep.subr.mxu0 0.0
    %321 = vmatpush2.msra.mxu0 0.0
    %322 = vmatprep.subr.mxu0 0.0
    %323 = vmatpush2.msra.mxu0 0.0
    %324 = vmatprep.subr.mxu0 0.0
    %325 = vmatpush2.msra.mxu0 0.0
    %326 = vmatprep.subr.mxu0 0.0
    %327 = vmatpush2.msra.mxu0 0.0
    %328 = vmatprep.subr.mxu0 0.0
    %329 = vmatpush2.msra.mxu0 0.0
    %330 = vmatprep.subr.mxu0 0.0
    %331 = vmatpush2.msra.mxu0 0.0
    %332 = vmatprep.mubr.f32.mxu0 0.0
    %333 = vmatmul.mubr.f32.gmra.mxu0 %v173
    %v334 = vpop.f32.mrf.mxu0
    %v335 = vadd.f32 0.0, %v334
    %v336 = vpop.f32.mrf.mxu0
    %337 = vmatprep.mubr.f32.mxu0 0.0
    %338 = vmatmul.mubr.f32.gmra.mxu0 %v176
    %v339 = vpop.f32.mrf.mxu0
    %v340 = vadd.f32 0.0, %v339
    %v341 = vpop.f32.mrf.mxu0
    %342 = vmatprep.mubr.f32.mxu0 0.0
    %343 = vmatmul.mubr.f32.gmra.mxu0 %v179
    %v344 = vpop.f32.mrf.mxu0
    %v345 = vadd.f32 0.0, %v344
    %v346 = vpop.f32.mrf.mxu0
    %347 = vmatprep.mubr.f32.mxu0 0.0
    %348 = vmatmul.mubr.f32.gmra.mxu0 %v182
    %v349 = vpop.f32.mrf.mxu0
    %v350 = vadd.f32 0.0, %v349
    %v351 = vpop.f32.mrf.mxu0
    %352 = vmatprep.mubr.f32.mxu0 0.0
    %353 = vmatmul.mubr.f32.gmra.mxu0 %v185
    %v354 = vpop.f32.mrf.mxu0
    %v355 = vadd.f32 0.0, %v354
    %v356 = vpop.f32.mrf.mxu0
    %357 = vmatprep.mubr.f32.mxu0 0.0
    %358 = vmatmul.mubr.f32.gmra.mxu0 %v188
    %v359 = vpop.f32.mrf.mxu0
    %v360 = vadd.f32 0.0, %v359
    %v361 = vpop.f32.mrf.mxu0
    %362 = vmatprep.mubr.f32.mxu0 0.0
    %363 = vmatmul.mubr.f32.gmra.mxu0 %v191
    %v364 = vpop.f32.mrf.mxu0
    %v365 = vadd.f32 0.0, %v364
    %v366 = vpop.f32.mrf.mxu0
    %367 = vmatprep.mubr.f32.mxu0 0.0
    %368 = vmatmul.mubr.f32.gmra.mxu0 %v194
    %v369 = vpop.f32.mrf.mxu0
    %v370 = vadd.f32 0.0, %v369
    %v371 = vpop.f32.mrf.mxu0
    %372 = vmatprep.mubr.f32.mxu0 0.0
    %373 = vmatmul.mubr.f32.gmra.mxu0 %v197
    %v374 = vpop.f32.mrf.mxu0
    %v375 = vadd.f32 0.0, %v374
    %v376 = vpop.f32.mrf.mxu0
    %377 = vmatprep.mubr.f32.mxu0 0.0
    %378 = vmatmul.mubr.f32.gmra.mxu0 %v200
    %v379 = vpop.f32.mrf.mxu0
    %v380 = vadd.f32 0.0, %v379
    %v381 = vpop.f32.mrf.mxu0
    %382 = vmatprep.mubr.f32.mxu0 0.0
    %383 = vmatmul.mubr.f32.gmra.mxu0 %v203
    %v384 = vpop.f32.mrf.mxu0
    %v385 = vadd.f32 0.0, %v384
    %v386 = vpop.f32.mrf.mxu0
    %387 = vmatprep.mubr.f32.mxu0 0.0
    %388 = vmatmul.mubr.f32.gmra.mxu0 %v206
    %v389 = vpop.f32.mrf.mxu0
    %v390 = vadd.f32 0.0, %v389
    %v391 = vpop.f32.mrf.mxu0
    %392 = vmatprep.mubr.f32.mxu0 0.0
    %393 = vmatmul.mubr.f32.gmra.mxu0 %v209
    %v394 = vpop.f32.mrf.mxu0
    %v395 = vadd.f32 0.0, %v394
    %v396 = vpop.f32.mrf.mxu0
    %397 = vmatprep.mubr.f32.mxu0 0.0
    %398 = vmatmul.mubr.f32.gmra.mxu0 %v212
    %v399 = vpop.f32.mrf.mxu0
    %v400 = vadd.f32 0.0, %v399
    %v401 = vpop.f32.mrf.mxu0
    %402 = vmatprep.mubr.f32.mxu0 0.0
    %403 = vmatmul.mubr.f32.gmra.mxu0 %v215
    %v404 = vpop.f32.mrf.mxu0
    %v405 = vadd.f32 0.0, %v404
    %v406 = vpop.f32.mrf.mxu0
    %407 = vmatprep.mubr.f32.mxu0 0.0
    %408 = vmatmul.mubr.f32.gmra.mxu0 %v218
    %v409 = vpop.f32.mrf.mxu0
    %v410 = vadd.f32 0.0, %v409
    %v411 = vpop.f32.mrf.mxu0
    %412 = vmatprep.mubr.f32.mxu0 0.0
    %413 = vmatmul.mubr.f32.gmra.mxu0 %v221
    %v414 = vpop.f32.mrf.mxu0
    %v415 = vadd.f32 0.0, %v414
    %v416 = vpop.f32.mrf.mxu0
    %417 = vmatprep.mubr.f32.mxu0 0.0
    %418 = vmatmul.mubr.f32.gmra.mxu0 %v224
    %v419 = vpop.f32.mrf.mxu0
    %v420 = vadd.f32 0.0, %v419
    %v421 = vpop.f32.mrf.mxu0
    %422 = vmatprep.mubr.f32.mxu0 0.0
    %423 = vmatmul.mubr.f32.gmra.mxu0 %v227
    %v424 = vpop.f32.mrf.mxu0
    %v425 = vadd.f32 0.0, %v424
    %v426 = vpop.f32.mrf.mxu0
    %427 = vmatprep.mubr.f32.mxu0 0.0
    %428 = vmatmul.mubr.f32.gmra.mxu0 %v230
    %v429 = vpop.f32.mrf.mxu0
    %v430 = vadd.f32 0.0, %v429
    %v431 = vpop.f32.mrf.mxu0
    %432 = vmatprep.mubr.f32.mxu0 0.0
    %433 = vmatmul.mubr.f32.gmra.mxu0 %v233
    %v434 = vpop.f32.mrf.mxu0
    %v435 = vadd.f32 0.0, %v434
    %v436 = vpop.f32.mrf.mxu0
    %437 = vmatprep.mubr.f32.mxu0 0.0
    %438 = vmatmul.mubr.f32.gmra.mxu0 %v236
    %v439 = vpop.f32.mrf.mxu0
    %v440 = vadd.f32 0.0, %v439
    %v441 = vpop.f32.mrf.mxu0
    %442 = vmatprep.mubr.f32.mxu0 0.0
    %443 = vmatmul.mubr.f32.gmra.mxu0 %v239
    %v444 = vpop.f32.mrf.mxu0
    %v445 = vadd.f32 0.0, %v444
    %v446 = vpop.f32.mrf.mxu0
    %447 = vmatprep.mubr.f32.mxu0 0.0
    %448 = vmatmul.mubr.f32.gmra.mxu0 %v242
    %v449 = vpop.f32.mrf.mxu0
    %v450 = vadd.f32 0.0, %v449
    %v451 = vpop.f32.mrf.mxu0
    %452 = vmatprep.mubr.f32.mxu0 0.0
    %453 = vmatmul.mubr.f32.gmra.mxu0 %v245
    %v454 = vpop.f32.mrf.mxu0
    %v455 = vadd.f32 0.0, %v454
    %v456 = vpop.f32.mrf.mxu0
    %457 = vmatprep.mubr.f32.mxu0 0.0
    %458 = vmatmul.mubr.f32.gmra.mxu0 %v248
    %v459 = vpop.f32.mrf.mxu0
    %v460 = vadd.f32 0.0, %v459
    %v461 = vpop.f32.mrf.mxu0
    %462 = vmatprep.mubr.f32.mxu0 0.0
    %463 = vmatmul.mubr.f32.gmra.mxu0 %v251
    %v464 = vpop.f32.mrf.mxu0
    %v465 = vadd.f32 0.0, %v464
    %v466 = vpop.f32.mrf.mxu0
    %467 = vmatprep.mubr.f32.mxu0 0.0
    %468 = vmatmul.mubr.f32.gmra.mxu0 %v254
    %v469 = vpop.f32.mrf.mxu0
    %v470 = vadd.f32 0.0, %v469
    %v471 = vpop.f32.mrf.mxu0
    %472 = vmatprep.mubr.f32.mxu0 0.0
    %473 = vmatmul.mubr.f32.gmra.mxu0 %v257
    %v474 = vpop.f32.mrf.mxu0
    %v475 = vadd.f32 0.0, %v474
    %v476 = vpop.f32.mrf.mxu0
    %477 = vmatprep.mubr.f32.mxu0 0.0
    %478 = vmatmul.mubr.f32.gmra.mxu0 %v260
    %v479 = vpop.f32.mrf.mxu0
    %v480 = vadd.f32 0.0, %v479
    %v481 = vpop.f32.mrf.mxu0
    %482 = vmatprep.mubr.f32.mxu0 0.0
    %483 = vmatmul.mubr.f32.gmra.mxu0 %v263
    %v484 = vpop.f32.mrf.mxu0
    %v485 = vadd.f32 0.0, %v484
    %v486 = vpop.f32.mrf.mxu0
    %487 = vmatprep.mubr.f32.mxu0 0.0
    %488 = vmatmul.mubr.f32.gmra.mxu0 %v266
    %v489 = vpop.f32.mrf.mxu0
    %v490 = vadd.f32 0.0, %v489
    %v491 = vpop.f32.mrf.mxu0
    %492 = vdwg.mxu0
    %v493 = vld [vmem:[%s4] sm:$0xff]
    %v494 = vld [vmem:[%s4 + $0x8] sm:$0xff]
    %v495 = vld [vmem:[%s4 + $0x10] sm:$0xff]
    %v496 = vld [vmem:[%s4 + $0x18] sm:$0xff]
    %497 = vmatprep.subr.mxu0 0.0
    %498 = vmatpush1.msra.mxu0 0.0
    %499 = vmatprep.subr.mxu0 0.0
    %500 = vmatpush1.msra.mxu0 0.0
    %501 = vmatprep.subr.mxu0 0.0
    %502 = vmatpush1.msra.mxu0 0.0
    %503 = vmatprep.subr.mxu0 0.0
    %504 = vmatpush1.msra.mxu0 0.0
    %505 = vmatprep.subr.mxu0 0.0
    %506 = vmatpush1.msra.mxu0 0.0
    %507 = vmatprep.subr.mxu0 0.0
    %508 = vmatpush1.msra.mxu0 0.0
    %509 = vmatprep.subr.mxu0 0.0
    %510 = vmatpush1.msra.mxu0 0.0
    %511 = vmatprep.subr.mxu0 0.0
    %512 = vmatpush1.msra.mxu0 0.0
    %513 = vmatprep.subr.mxu0 0.0
    %514 = vmatpush1.msra.mxu0 0.0
    %515 = vmatprep.subr.mxu0 0.0
    %516 = vmatpush1.msra.mxu0 0.0
    %517 = vmatprep.subr.mxu0 0.0
    %518 = vmatpush1.msra.mxu0 0.0
    %519 = vmatprep.subr.mxu0 0.0
    %520 = vmatpush1.msra.mxu0 0.0
    %521 = vmatprep.subr.mxu0 0.0
    %522 = vmatpush1.msra.mxu0 %v496
    %523 = vmatprep.subr.mxu0 0.0
    %524 = vmatpush1.msra.mxu0 %v495
    %525 = vmatprep.subr.mxu0 0.0
    %526 = vmatpush1.msra.mxu0 %v494
    %527 = vmatprep.subr.mxu0 0.0
    %528 = vmatpush1.msra.mxu0 %v493
    %529 = vmatprep.subr.mxu0 0.0
    %530 = vmatpush2.msra.mxu0 0.0
    %531 = vmatprep.subr.mxu0 0.0
    %532 = vmatpush2.msra.mxu0 0.0
    %533 = vmatprep.subr.mxu0 0.0
    %534 = vmatpush2.msra.mxu0 0.0
    %535 = vmatprep.subr.mxu0 0.0
    %536 = vmatpush2.msra.mxu0 0.0
    %537 = vmatprep.subr.mxu0 0.0
    %538 = vmatpush2.msra.mxu0 0.0
    %539 = vmatprep.subr.mxu0 0.0
    %540 = vmatpush2.msra.mxu0 0.0
    %541 = vmatprep.subr.mxu0 0.0
    %542 = vmatpush2.msra.mxu0 0.0
    %543 = vmatprep.subr.mxu0 0.0
    %544 = vmatpush2.msra.mxu0 0.0
    %545 = vmatprep.subr.mxu0 0.0
    %546 = vmatpush2.msra.mxu0 0.0
    %547 = vmatprep.subr.mxu0 0.0
    %548 = vmatpush2.msra.mxu0 0.0
    %549 = vmatprep.subr.mxu0 0.0
    %550 = vmatpush2.msra.mxu0 0.0
    %551 = vmatprep.subr.mxu0 0.0
    %552 = vmatpush2.msra.mxu0 0.0
    %553 = vmatprep.subr.mxu0 0.0
    %554 = vmatpush2.msra.mxu0 0.0
    %555 = vmatprep.subr.mxu0 0.0
    %556 = vmatpush2.msra.mxu0 0.0
    %557 = vmatprep.subr.mxu0 0.0
    %558 = vmatpush2.msra.mxu0 0.0
    %559 = vmatprep.subr.mxu0 0.0
    %560 = vmatpush2.msra.mxu0 0.0
    %561 = vmatprep.mubr.f32.mxu0 0.0
    %562 = vmatmul.mubr.f32.gmra.mxu0 %v173
    %v563 = vpop.f32.mrf.mxu0
    %v564 = vadd.f32 0.0, %v563
    %v565 = vpop.f32.mrf.mxu0
    %566 = vmatprep.mubr.f32.mxu0 0.0
    %567 = vmatmul.mubr.f32.gmra.mxu0 %v176
    %v568 = vpop.f32.mrf.mxu0
    %v569 = vadd.f32 0.0, %v568
    %v570 = vpop.f32.mrf.mxu0
    %571 = vmatprep.mubr.f32.mxu0 0.0
    %572 = vmatmul.mubr.f32.gmra.mxu0 %v179
    %v573 = vpop.f32.mrf.mxu0
    %v574 = vadd.f32 0.0, %v573
    %v575 = vpop.f32.mrf.mxu0
    %576 = vmatprep.mubr.f32.mxu0 0.0
    %577 = vmatmul.mubr.f32.gmra.mxu0 %v182
    %v578 = vpop.f32.mrf.mxu0
    %v579 = vadd.f32 0.0, %v578
    %v580 = vpop.f32.mrf.mxu0
    %581 = vmatprep.mubr.f32.mxu0 0.0
    %582 = vmatmul.mubr.f32.gmra.mxu0 %v185
    %v583 = vpop.f32.mrf.mxu0
    %v584 = vadd.f32 0.0, %v583
    %v585 = vpop.f32.mrf.mxu0
    %586 = vmatprep.mubr.f32.mxu0 0.0
    %587 = vmatmul.mubr.f32.gmra.mxu0 %v188
    %v588 = vpop.f32.mrf.mxu0
    %v589 = vadd.f32 0.0, %v588
    %v590 = vpop.f32.mrf.mxu0
    %591 = vmatprep.mubr.f32.mxu0 0.0
    %592 = vmatmul.mubr.f32.gmra.mxu0 %v191
    %v593 = vpop.f32.mrf.mxu0
    %v594 = vadd.f32 0.0, %v593
    %v595 = vpop.f32.mrf.mxu0
    %596 = vmatprep.mubr.f32.mxu0 0.0
    %597 = vmatmul.mubr.f32.gmra.mxu0 %v194
    %v598 = vpop.f32.mrf.mxu0
    %v599 = vadd.f32 0.0, %v598
    %v600 = vpop.f32.mrf.mxu0
    %601 = vmatprep.mubr.f32.mxu0 0.0
    %602 = vmatmul.mubr.f32.gmra.mxu0 %v197
    %v603 = vpop.f32.mrf.mxu0
    %v604 = vadd.f32 0.0, %v603
    %v605 = vpop.f32.mrf.mxu0
    %606 = vmatprep.mubr.f32.mxu0 0.0
    %607 = vmatmul.mubr.f32.gmra.mxu0 %v200
    %v608 = vpop.f32.mrf.mxu0
    %v609 = vadd.f32 0.0, %v608
    %v610 = vpop.f32.mrf.mxu0
    %611 = vmatprep.mubr.f32.mxu0 0.0
    %612 = vmatmul.mubr.f32.gmra.mxu0 %v203
    %v613 = vpop.f32.mrf.mxu0
    %v614 = vadd.f32 0.0, %v613
    %v615 = vpop.f32.mrf.mxu0
    %616 = vmatprep.mubr.f32.mxu0 0.0
    %617 = vmatmul.mubr.f32.gmra.mxu0 %v206
    %v618 = vpop.f32.mrf.mxu0
    %v619 = vadd.f32 0.0, %v618
    %v620 = vpop.f32.mrf.mxu0
    %621 = vmatprep.mubr.f32.mxu0 0.0
    %622 = vmatmul.mubr.f32.gmra.mxu0 %v209
    %v623 = vpop.f32.mrf.mxu0
    %v624 = vadd.f32 0.0, %v623
    %v625 = vpop.f32.mrf.mxu0
    %626 = vmatprep.mubr.f32.mxu0 0.0
    %627 = vmatmul.mubr.f32.gmra.mxu0 %v212
    %v628 = vpop.f32.mrf.mxu0
    %v629 = vadd.f32 0.0, %v628
    %v630 = vpop.f32.mrf.mxu0
    %631 = vmatprep.mubr.f32.mxu0 0.0
    %632 = vmatmul.mubr.f32.gmra.mxu0 %v215
    %v633 = vpop.f32.mrf.mxu0
    %v634 = vadd.f32 0.0, %v633
    %v635 = vpop.f32.mrf.mxu0
    %636 = vmatprep.mubr.f32.mxu0 0.0
    %637 = vmatmul.mubr.f32.gmra.mxu0 %v218
    %v638 = vpop.f32.mrf.mxu0
    %v639 = vadd.f32 0.0, %v638
    %v640 = vpop.f32.mrf.mxu0
    %641 = vmatprep.mubr.f32.mxu0 0.0
    %642 = vmatmul.mubr.f32.gmra.mxu0 %v221
    %v643 = vpop.f32.mrf.mxu0
    %v644 = vadd.f32 0.0, %v643
    %v645 = vpop.f32.mrf.mxu0
    %646 = vmatprep.mubr.f32.mxu0 0.0
    %647 = vmatmul.mubr.f32.gmra.mxu0 %v224
    %v648 = vpop.f32.mrf.mxu0
    %v649 = vadd.f32 0.0, %v648
    %v650 = vpop.f32.mrf.mxu0
    %651 = vmatprep.mubr.f32.mxu0 0.0
    %652 = vmatmul.mubr.f32.gmra.mxu0 %v227
    %v653 = vpop.f32.mrf.mxu0
    %v654 = vadd.f32 0.0, %v653
    %v655 = vpop.f32.mrf.mxu0
    %656 = vmatprep.mubr.f32.mxu0 0.0
    %657 = vmatmul.mubr.f32.gmra.mxu0 %v230
    %v658 = vpop.f32.mrf.mxu0
    %v659 = vadd.f32 0.0, %v658
    %v660 = vpop.f32.mrf.mxu0
    %661 = vmatprep.mubr.f32.mxu0 0.0
    %662 = vmatmul.mubr.f32.gmra.mxu0 %v233
    %v663 = vpop.f32.mrf.mxu0
    %v664 = vadd.f32 0.0, %v663
    %v665 = vpop.f32.mrf.mxu0
    %666 = vmatprep.mubr.f32.mxu0 0.0
    %667 = vmatmul.mubr.f32.gmra.mxu0 %v236
    %v668 = vpop.f32.mrf.mxu0
    %v669 = vadd.f32 0.0, %v668
    %v670 = vpop.f32.mrf.mxu0
    %671 = vmatprep.mubr.f32.mxu0 0.0
    %672 = vmatmul.mubr.f32.gmra.mxu0 %v239
    %v673 = vpop.f32.mrf.mxu0
    %v674 = vadd.f32 0.0, %v673
    %v675 = vpop.f32.mrf.mxu0
    %676 = vmatprep.mubr.f32.mxu0 0.0
    %677 = vmatmul.mubr.f32.gmra.mxu0 %v242
    %v678 = vpop.f32.mrf.mxu0
    %v679 = vadd.f32 0.0, %v678
    %v680 = vpop.f32.mrf.mxu0
    %681 = vmatprep.mubr.f32.mxu0 0.0
    %682 = vmatmul.mubr.f32.gmra.mxu0 %v245
    %v683 = vpop.f32.mrf.mxu0
    %v684 = vadd.f32 0.0, %v683
    %v685 = vpop.f32.mrf.mxu0
    %686 = vmatprep.mubr.f32.mxu0 0.0
    %687 = vmatmul.mubr.f32.gmra.mxu0 %v248
    %v688 = vpop.f32.mrf.mxu0
    %v689 = vadd.f32 0.0, %v688
    %v690 = vpop.f32.mrf.mxu0
    %691 = vmatprep.mubr.f32.mxu0 0.0
    %692 = vmatmul.mubr.f32.gmra.mxu0 %v251
    %v693 = vpop.f32.mrf.mxu0
    %v694 = vadd.f32 0.0, %v693
    %v695 = vpop.f32.mrf.mxu0
    %696 = vmatprep.mubr.f32.mxu0 0.0
    %697 = vmatmul.mubr.f32.gmra.mxu0 %v254
    %v698 = vpop.f32.mrf.mxu0
    %v699 = vadd.f32 0.0, %v698
    %v700 = vpop.f32.mrf.mxu0
    %701 = vmatprep.mubr.f32.mxu0 0.0
    %702 = vmatmul.mubr.f32.gmra.mxu0 %v257
    %v703 = vpop.f32.mrf.mxu0
    %v704 = vadd.f32 0.0, %v703
    %v705 = vpop.f32.mrf.mxu0
    %706 = vmatprep.mubr.f32.mxu0 0.0
    %707 = vmatmul.mubr.f32.gmra.mxu0 %v260
    %v708 = vpop.f32.mrf.mxu0
    %v709 = vadd.f32 0.0, %v708
    %v710 = vpop.f32.mrf.mxu0
    %711 = vmatprep.mubr.f32.mxu0 0.0
    %712 = vmatmul.mubr.f32.gmra.mxu0 %v263
    %v713 = vpop.f32.mrf.mxu0
    %v714 = vadd.f32 0.0, %v713
    %v715 = vpop.f32.mrf.mxu0
    %716 = vmatprep.mubr.f32.mxu0 0.0
    %717 = vmatmul.mubr.f32.gmra.mxu0 %v266
    %v718 = vpop.f32.mrf.mxu0
    %v719 = vadd.f32 0.0, %v718
    %v720 = vpop.f32.mrf.mxu0
    %721 = vdwg.mxu0
    %v726 = vcombine.high %v150, %v150
    %v728 = vunpack.c.l.s4 1966171168
    %v729 = vunpack.c.0.s8 %v728
    %v730 = vlaneseq
    %v731 = vshrl.u32 %v730, 7
    %v732 = vsub.s32 %v729, %v731
    %v733 = vrot.slane %v150, %v732
    %v735 = vunpack.c.l.s4 1966171168
    %v736 = vunpack.c.0.s8 %v735
    %v737 = vlaneseq
    %v738 = vshrl.u32 %v737, 7
    %v739 = vsub.s32 %v736, %v738
    %v740 = vrot.slane %v726, %v739
    %v741 = vcombine.high %v733, %v733
    %v742 = vcombine.high %v740, %v740
    %v744 = vunpack.c.l.s4 1966171168
    %v745 = vunpack.c.0.s8 %v744
    %v746 = vlaneseq
    %v747 = vshrl.u32 %v746, 7
    %v748 = vsub.s32 %v745, %v747
    %v749 = vrot.slane %v733, %v748
    %v751 = vunpack.c.l.s4 1966171168
    %v752 = vunpack.c.0.s8 %v751
    %v753 = vlaneseq
    %v754 = vshrl.u32 %v753, 7
    %v755 = vsub.s32 %v752, %v754
    %v756 = vrot.slane %v740, %v755
    %v758 = vunpack.c.l.s4 1966171168
    %v759 = vunpack.c.0.s8 %v758
    %v760 = vlaneseq
    %v761 = vshrl.u32 %v760, 7
    %v762 = vsub.s32 %v759, %v761
    %v763 = vrot.slane %v741, %v762
    %v765 = vunpack.c.l.s4 1966171168
    %v766 = vunpack.c.0.s8 %v765
    %v767 = vlaneseq
    %v768 = vshrl.u32 %v767, 7
    %v769 = vsub.s32 %v766, %v768
    %v770 = vrot.slane %v742, %v769
    %v771 = vcombine.high %v749, %v749
    %v772 = vcombine.high %v756, %v756
    %v773 = vcombine.high %v763, %v763
    %v774 = vcombine.high %v770, %v770
    %v775 = vcombine.high %v155, %v155
    %v777 = vunpack.c.l.s4 1966171168
    %v778 = vunpack.c.0.s8 %v777
    %v779 = vlaneseq
    %v780 = vshrl.u32 %v779, 7
    %v781 = vsub.s32 %v778, %v780
    %v782 = vrot.slane %v155, %v781
    %v784 = vunpack.c.l.s4 1966171168
    %v785 = vunpack.c.0.s8 %v784
    %v786 = vlaneseq
    %v787 = vshrl.u32 %v786, 7
    %v788 = vsub.s32 %v785, %v787
    %v789 = vrot.slane %v775, %v788
    %v790 = vcombine.high %v782, %v782
    %v791 = vcombine.high %v789, %v789
    %v793 = vunpack.c.l.s4 1966171168
    %v794 = vunpack.c.0.s8 %v793
    %v795 = vlaneseq
    %v796 = vshrl.u32 %v795, 7
    %v797 = vsub.s32 %v794, %v796
    %v798 = vrot.slane %v782, %v797
    %v800 = vunpack.c.l.s4 1966171168
    %v801 = vunpack.c.0.s8 %v800
    %v802 = vlaneseq
    %v803 = vshrl.u32 %v802, 7
    %v804 = vsub.s32 %v801, %v803
    %v805 = vrot.slane %v789, %v804
    %v807 = vunpack.c.l.s4 1966171168
    %v808 = vunpack.c.0.s8 %v807
    %v809 = vlaneseq
    %v810 = vshrl.u32 %v809, 7
    %v811 = vsub.s32 %v808, %v810
    %v812 = vrot.slane %v790, %v811
    %v814 = vunpack.c.l.s4 1966171168
    %v815 = vunpack.c.0.s8 %v814
    %v816 = vlaneseq
    %v817 = vshrl.u32 %v816, 7
    %v818 = vsub.s32 %v815, %v817
    %v819 = vrot.slane %v791, %v818
    %v820 = vcombine.high %v798, %v798
    %v821 = vcombine.high %v805, %v805
    %v822 = vcombine.high %v812, %v812
    %v823 = vcombine.high %v819, %v819
    %v824 = vcombine.high %v160, %v160
    %v826 = vunpack.c.l.s4 1966171168
    %v827 = vunpack.c.0.s8 %v826
    %v828 = vlaneseq
    %v829 = vshrl.u32 %v828, 7
    %v830 = vsub.s32 %v827, %v829
    %v831 = vrot.slane %v160, %v830
    %v833 = vunpack.c.l.s4 1966171168
    %v834 = vunpack.c.0.s8 %v833
    %v835 = vlaneseq
    %v836 = vshrl.u32 %v835, 7
    %v837 = vsub.s32 %v834, %v836
    %v838 = vrot.slane %v824, %v837
    %v839 = vcombine.high %v831, %v831
    %v840 = vcombine.high %v838, %v838
    %v842 = vunpack.c.l.s4 1966171168
    %v843 = vunpack.c.0.s8 %v842
    %v844 = vlaneseq
    %v845 = vshrl.u32 %v844, 7
    %v846 = vsub.s32 %v843, %v845
    %v847 = vrot.slane %v831, %v846
    %v849 = vunpack.c.l.s4 1966171168
    %v850 = vunpack.c.0.s8 %v849
    %v851 = vlaneseq
    %v852 = vshrl.u32 %v851, 7
    %v853 = vsub.s32 %v850, %v852
    %v854 = vrot.slane %v838, %v853
    %v856 = vunpack.c.l.s4 1966171168
    %v857 = vunpack.c.0.s8 %v856
    %v858 = vlaneseq
    %v859 = vshrl.u32 %v858, 7
    %v860 = vsub.s32 %v857, %v859
    %v861 = vrot.slane %v839, %v860
    %v863 = vunpack.c.l.s4 1966171168
    %v864 = vunpack.c.0.s8 %v863
    %v865 = vlaneseq
    %v866 = vshrl.u32 %v865, 7
    %v867 = vsub.s32 %v864, %v866
    %v868 = vrot.slane %v840, %v867
    %v869 = vcombine.high %v847, %v847
    %v870 = vcombine.high %v854, %v854
    %v871 = vcombine.high %v861, %v861
    %v872 = vcombine.high %v868, %v868
    %v873 = vcombine.high %v165, %v165
    %v875 = vunpack.c.l.s4 1966171168
    %v876 = vunpack.c.0.s8 %v875
    %v877 = vlaneseq
    %v878 = vshrl.u32 %v877, 7
    %v879 = vsub.s32 %v876, %v878
    %v880 = vrot.slane %v165, %v879
    %v882 = vunpack.c.l.s4 1966171168
    %v883 = vunpack.c.0.s8 %v882
    %v884 = vlaneseq
    %v885 = vshrl.u32 %v884, 7
    %v886 = vsub.s32 %v883, %v885
    %v887 = vrot.slane %v873, %v886
    %v888 = vcombine.high %v880, %v880
    %v889 = vcombine.high %v887, %v887
    %v891 = vunpack.c.l.s4 1966171168
    %v892 = vunpack.c.0.s8 %v891
    %v893 = vlaneseq
    %v894 = vshrl.u32 %v893, 7
    %v895 = vsub.s32 %v892, %v894
    %v896 = vrot.slane %v880, %v895
    %v898 = vunpack.c.l.s4 1966171168
    %v899 = vunpack.c.0.s8 %v898
    %v900 = vlaneseq
    %v901 = vshrl.u32 %v900, 7
    %v902 = vsub.s32 %v899, %v901
    %v903 = vrot.slane %v887, %v902
    %v905 = vunpack.c.l.s4 1966171168
    %v906 = vunpack.c.0.s8 %v905
    %v907 = vlaneseq
    %v908 = vshrl.u32 %v907, 7
    %v909 = vsub.s32 %v906, %v908
    %v910 = vrot.slane %v888, %v909
    %v912 = vunpack.c.l.s4 1966171168
    %v913 = vunpack.c.0.s8 %v912
    %v914 = vlaneseq
    %v915 = vshrl.u32 %v914, 7
    %v916 = vsub.s32 %v913, %v915
    %v917 = vrot.slane %v889, %v916
    %v918 = vcombine.high %v896, %v896
    %v919 = vcombine.high %v903, %v903
    %v920 = vcombine.high %v910, %v910
    %v921 = vcombine.high %v917, %v917
    %v922 = vlaneseq
    %v923 = vshrl.u32 %v922, 7
    %v924 = vsub.s32 0, %v923
    %v925 = vrot.slane %v749, %v924
    %v926 = vlaneseq
    %v927 = vshrl.u32 %v926, 7
    %v928 = vsub.s32 0, %v927
    %v929 = vrot.slane %v763, %v928
    %v930 = vlaneseq
    %v931 = vshrl.u32 %v930, 7
    %v932 = vsub.s32 0, %v931
    %v933 = vrot.slane %v771, %v932
    %v934 = vlaneseq
    %v935 = vshrl.u32 %v934, 7
    %v936 = vsub.s32 0, %v935
    %v937 = vrot.slane %v773, %v936
    %v938 = vlaneseq
    %v939 = vshrl.u32 %v938, 7
    %v940 = vsub.s32 0, %v939
    %v941 = vrot.slane %v756, %v940
    %v942 = vlaneseq
    %v943 = vshrl.u32 %v942, 7
    %v944 = vsub.s32 0, %v943
    %v945 = vrot.slane %v770, %v944
    %v946 = vlaneseq
    %v947 = vshrl.u32 %v946, 7
    %v948 = vsub.s32 0, %v947
    %v949 = vrot.slane %v772, %v948
    %v950 = vlaneseq
    %v951 = vshrl.u32 %v950, 7
    %v952 = vsub.s32 0, %v951
    %v953 = vrot.slane %v774, %v952
    %v954 = vlaneseq
    %v955 = vshrl.u32 %v954, 7
    %v956 = vsub.s32 0, %v955
    %v957 = vrot.slane %v798, %v956
    %v958 = vlaneseq
    %v959 = vshrl.u32 %v958, 7
    %v960 = vsub.s32 0, %v959
    %v961 = vrot.slane %v812, %v960
    %v962 = vlaneseq
    %v963 = vshrl.u32 %v962, 7
    %v964 = vsub.s32 0, %v963
    %v965 = vrot.slane %v820, %v964
    %v966 = vlaneseq
    %v967 = vshrl.u32 %v966, 7
    %v968 = vsub.s32 0, %v967
    %v969 = vrot.slane %v822, %v968
    %v970 = vlaneseq
    %v971 = vshrl.u32 %v970, 7
    %v972 = vsub.s32 0, %v971
    %v973 = vrot.slane %v805, %v972
    %v974 = vlaneseq
    %v975 = vshrl.u32 %v974, 7
    %v976 = vsub.s32 0, %v975
    %v977 = vrot.slane %v819, %v976
    %v978 = vlaneseq
    %v979 = vshrl.u32 %v978, 7
    %v980 = vsub.s32 0, %v979
    %v981 = vrot.slane %v821, %v980
    %v982 = vlaneseq
    %v983 = vshrl.u32 %v982, 7
    %v984 = vsub.s32 0, %v983
    %v985 = vrot.slane %v823, %v984
    %v986 = vlaneseq
    %v987 = vshrl.u32 %v986, 7
    %v988 = vsub.s32 0, %v987
    %v989 = vrot.slane %v847, %v988
    %v990 = vlaneseq
    %v991 = vshrl.u32 %v990, 7
    %v992 = vsub.s32 0, %v991
    %v993 = vrot.slane %v861, %v992
    %v994 = vlaneseq
    %v995 = vshrl.u32 %v994, 7
    %v996 = vsub.s32 0, %v995
    %v997 = vrot.slane %v869, %v996
    %v998 = vlaneseq
    %v999 = vshrl.u32 %v998, 7
    %v1000 = vsub.s32 0, %v999
    %v1001 = vrot.slane %v871, %v1000
    %v1002 = vlaneseq
    %v1003 = vshrl.u32 %v1002, 7
    %v1004 = vsub.s32 0, %v1003
    %v1005 = vrot.slane %v854, %v1004
    %v1006 = vlaneseq
    %v1007 = vshrl.u32 %v1006, 7
    %v1008 = vsub.s32 0, %v1007
    %v1009 = vrot.slane %v868, %v1008
    %v1010 = vlaneseq
    %v1011 = vshrl.u32 %v1010, 7
    %v1012 = vsub.s32 0, %v1011
    %v1013 = vrot.slane %v870, %v1012
    %v1014 = vlaneseq
    %v1015 = vshrl.u32 %v1014, 7
    %v1016 = vsub.s32 0, %v1015
    %v1017 = vrot.slane %v872, %v1016
    %v1018 = vlaneseq
    %v1019 = vshrl.u32 %v1018, 7
    %v1020 = vsub.s32 0, %v1019
    %v1021 = vrot.slane %v896, %v1020
    %v1022 = vlaneseq
    %v1023 = vshrl.u32 %v1022, 7
    %v1024 = vsub.s32 0, %v1023
    %v1025 = vrot.slane %v910, %v1024
    %v1026 = vlaneseq
    %v1027 = vshrl.u32 %v1026, 7
    %v1028 = vsub.s32 0, %v1027
    %v1029 = vrot.slane %v918, %v1028
    %v1030 = vlaneseq
    %v1031 = vshrl.u32 %v1030, 7
    %v1032 = vsub.s32 0, %v1031
    %v1033 = vrot.slane %v920, %v1032
    %v1034 = vlaneseq
    %v1035 = vshrl.u32 %v1034, 7
    %v1036 = vsub.s32 0, %v1035
    %v1037 = vrot.slane %v903, %v1036
    %v1038 = vlaneseq
    %v1039 = vshrl.u32 %v1038, 7
    %v1040 = vsub.s32 0, %v1039
    %v1041 = vrot.slane %v917, %v1040
    %v1042 = vlaneseq
    %v1043 = vshrl.u32 %v1042, 7
    %v1044 = vsub.s32 0, %v1043
    %v1045 = vrot.slane %v919, %v1044
    %v1046 = vlaneseq
    %v1047 = vshrl.u32 %v1046, 7
    %v1048 = vsub.s32 0, %v1047
    %v1049 = vrot.slane %v921, %v1048
    %v1082 = vmul.f32 %v925, %v335
    %v1083 = vmul.f32 %v929, %v340
    %v1084 = vmul.f32 %v933, %v345
    %v1085 = vmul.f32 %v937, %v350
    %v1086 = vmul.f32 %v941, %v355
    %v1087 = vmul.f32 %v945, %v360
    %v1088 = vmul.f32 %v949, %v365
    %v1089 = vmul.f32 %v953, %v370
    %v1090 = vmul.f32 %v957, %v375
    %v1091 = vmul.f32 %v961, %v380
    %v1092 = vmul.f32 %v965, %v385
    %v1093 = vmul.f32 %v969, %v390
    %v1094 = vmul.f32 %v973, %v395
    %v1095 = vmul.f32 %v977, %v400
    %v1096 = vmul.f32 %v981, %v405
    %v1097 = vmul.f32 %v985, %v410
    %v1098 = vmul.f32 %v989, %v415
    %v1099 = vmul.f32 %v993, %v420
    %v1100 = vmul.f32 %v997, %v425
    %v1101 = vmul.f32 %v1001, %v430
    %v1102 = vmul.f32 %v1005, %v435
    %v1103 = vmul.f32 %v1009, %v440
    %v1104 = vmul.f32 %v1013, %v445
    %v1105 = vmul.f32 %v1017, %v450
    %v1106 = vmul.f32 %v1021, %v455
    %v1107 = vmul.f32 %v1025, %v460
    %v1108 = vmul.f32 %v1029, %v465
    %v1109 = vmul.f32 %v1033, %v470
    %v1110 = vmul.f32 %v1037, %v475
    %v1111 = vmul.f32 %v1041, %v480
    %v1112 = vmul.f32 %v1045, %v485
    %v1113 = vmul.f32 %v1049, %v490
    %v1114 = vld [vmem:[%s7] sm:$0xff]
    %v1115 = vld [vmem:[%s7 + $0x8] sm:$0xff]
    %v1116 = vld [vmem:[%s7 + $0x10] sm:$0xff]
    %v1117 = vld [vmem:[%s7 + $0x18] sm:$0xff]
    %v1119 = vsel %vm70, %v1082, 0
    %v1122 = vsel %vm70, %v1083, 0
    %v1125 = vsel %vm70, %v1084, 0
    %v1128 = vsel %vm70, %v1085, 0
    %v1131 = vsel %vm70, %v1086, 0
    %v1134 = vsel %vm70, %v1087, 0
    %v1137 = vsel %vm70, %v1088, 0
    %v1140 = vsel %vm70, %v1089, 0
    %v1143 = vsel %vm70, %v1090, 0
    %v1146 = vsel %vm70, %v1091, 0
    %v1149 = vsel %vm70, %v1092, 0
    %v1152 = vsel %vm70, %v1093, 0
    %v1155 = vsel %vm70, %v1094, 0
    %v1158 = vsel %vm70, %v1095, 0
    %v1161 = vsel %vm70, %v1096, 0
    %v1164 = vsel %vm70, %v1097, 0
    %v1167 = vsel %vm70, %v1098, 0
    %v1170 = vsel %vm70, %v1099, 0
    %v1173 = vsel %vm70, %v1100, 0
    %v1176 = vsel %vm70, %v1101, 0
    %v1179 = vsel %vm70, %v1102, 0
    %v1182 = vsel %vm70, %v1103, 0
    %v1185 = vsel %vm70, %v1104, 0
    %v1188 = vsel %vm70, %v1105, 0
    %v1191 = vsel %vm70, %v1106, 0
    %v1194 = vsel %vm70, %v1107, 0
    %v1197 = vsel %vm70, %v1108, 0
    %v1200 = vsel %vm70, %v1109, 0
    %v1203 = vsel %vm70, %v1110, 0
    %v1206 = vsel %vm70, %v1111, 0
    %v1209 = vsel %vm70, %v1112, 0
    %v1212 = vsel %vm70, %v1113, 0
    %1214 = vmatprep.subr.mxu0 0.0
    %1215 = vmatpush1.msra.mxu0 0.0
    %1216 = vmatprep.subr.mxu0 0.0
    %1217 = vmatpush1.msra.mxu0 0.0
    %1218 = vmatprep.subr.mxu0 0.0
    %1219 = vmatpush1.msra.mxu0 0.0
    %1220 = vmatprep.subr.mxu0 0.0
    %1221 = vmatpush1.msra.mxu0 0.0
    %1222 = vmatprep.subr.mxu0 0.0
    %1223 = vmatpush1.msra.mxu0 0.0
    %1224 = vmatprep.subr.mxu0 0.0
    %1225 = vmatpush1.msra.mxu0 0.0
    %1226 = vmatprep.subr.mxu0 0.0
    %1227 = vmatpush1.msra.mxu0 0.0
    %1228 = vmatprep.subr.mxu0 0.0
    %1229 = vmatpush1.msra.mxu0 0.0
    %1230 = vmatprep.subr.mxu0 0.0
    %1231 = vmatpush1.msra.mxu0 0.0
    %1232 = vmatprep.subr.mxu0 0.0
    %1233 = vmatpush1.msra.mxu0 0.0
    %1234 = vmatprep.subr.mxu0 0.0
    %1235 = vmatpush1.msra.mxu0 0.0
    %1236 = vmatprep.subr.mxu0 0.0
    %1237 = vmatpush1.msra.mxu0 0.0
    %1238 = vmatprep.subr.mxu0 0.0
    %1239 = vmatpush1.msra.mxu0 %v1117
    %1240 = vmatprep.subr.mxu0 0.0
    %1241 = vmatpush1.msra.mxu0 %v1116
    %1242 = vmatprep.subr.mxu0 0.0
    %1243 = vmatpush1.msra.mxu0 %v1115
    %1244 = vmatprep.subr.mxu0 0.0
    %1245 = vmatpush1.msra.mxu0 %v1114
    %1246 = vmatprep.subr.mxu0 0.0
    %1247 = vmatpush2.msra.mxu0 0.0
    %1248 = vmatprep.subr.mxu0 0.0
    %1249 = vmatpush2.msra.mxu0 0.0
    %1250 = vmatprep.subr.mxu0 0.0
    %1251 = vmatpush2.msra.mxu0 0.0
    %1252 = vmatprep.subr.mxu0 0.0
    %1253 = vmatpush2.msra.mxu0 0.0
    %1254 = vmatprep.subr.mxu0 0.0
    %1255 = vmatpush2.msra.mxu0 0.0
    %1256 = vmatprep.subr.mxu0 0.0
    %1257 = vmatpush2.msra.mxu0 0.0
    %1258 = vmatprep.subr.mxu0 0.0
    %1259 = vmatpush2.msra.mxu0 0.0
    %1260 = vmatprep.subr.mxu0 0.0
    %1261 = vmatpush2.msra.mxu0 0.0
    %1262 = vmatprep.subr.mxu0 0.0
    %1263 = vmatpush2.msra.mxu0 0.0
    %1264 = vmatprep.subr.mxu0 0.0
    %1265 = vmatpush2.msra.mxu0 0.0
    %1266 = vmatprep.subr.mxu0 0.0
    %1267 = vmatpush2.msra.mxu0 0.0
    %1268 = vmatprep.subr.mxu0 0.0
    %1269 = vmatpush2.msra.mxu0 0.0
    %1270 = vmatprep.subr.mxu0 0.0
    %1271 = vmatpush2.msra.mxu0 0.0
    %1272 = vmatprep.subr.mxu0 0.0
    %1273 = vmatpush2.msra.mxu0 0.0
    %1274 = vmatprep.subr.mxu0 0.0
    %1275 = vmatpush2.msra.mxu0 0.0
    %1276 = vmatprep.subr.mxu0 0.0
    %1277 = vmatpush2.msra.mxu0 0.0
    %1278 = vmatprep.mubr.f32.mxu0 0.0
    %1279 = vmatmul.mubr.f32.gmra.mxu0 %v1119
    %v1280 = vpop.f32.mrf.mxu0
    %v1281 = vadd.f32 0.0, %v1280
    %v1282 = vpop.f32.mrf.mxu0
    %1283 = vmatprep.mubr.f32.mxu0 0.0
    %1284 = vmatmul.mubr.f32.gmra.mxu0 %v1122
    %v1285 = vpop.f32.mrf.mxu0
    %v1286 = vadd.f32 0.0, %v1285
    %v1287 = vpop.f32.mrf.mxu0
    %1288 = vmatprep.mubr.f32.mxu0 0.0
    %1289 = vmatmul.mubr.f32.gmra.mxu0 %v1125
    %v1290 = vpop.f32.mrf.mxu0
    %v1291 = vadd.f32 0.0, %v1290
    %v1292 = vpop.f32.mrf.mxu0
    %1293 = vmatprep.mubr.f32.mxu0 0.0
    %1294 = vmatmul.mubr.f32.gmra.mxu0 %v1128
    %v1295 = vpop.f32.mrf.mxu0
    %v1296 = vadd.f32 0.0, %v1295
    %v1297 = vpop.f32.mrf.mxu0
    %1298 = vmatprep.mubr.f32.mxu0 0.0
    %1299 = vmatmul.mubr.f32.gmra.mxu0 %v1131
    %v1300 = vpop.f32.mrf.mxu0
    %v1301 = vadd.f32 0.0, %v1300
    %v1302 = vpop.f32.mrf.mxu0
    %1303 = vmatprep.mubr.f32.mxu0 0.0
    %1304 = vmatmul.mubr.f32.gmra.mxu0 %v1134
    %v1305 = vpop.f32.mrf.mxu0
    %v1306 = vadd.f32 0.0, %v1305
    %v1307 = vpop.f32.mrf.mxu0
    %1308 = vmatprep.mubr.f32.mxu0 0.0
    %1309 = vmatmul.mubr.f32.gmra.mxu0 %v1137
    %v1310 = vpop.f32.mrf.mxu0
    %v1311 = vadd.f32 0.0, %v1310
    %v1312 = vpop.f32.mrf.mxu0
    %1313 = vmatprep.mubr.f32.mxu0 0.0
    %1314 = vmatmul.mubr.f32.gmra.mxu0 %v1140
    %v1315 = vpop.f32.mrf.mxu0
    %v1316 = vadd.f32 0.0, %v1315
    %v1317 = vpop.f32.mrf.mxu0
    %1318 = vmatprep.mubr.f32.mxu0 0.0
    %1319 = vmatmul.mubr.f32.gmra.mxu0 %v1143
    %v1320 = vpop.f32.mrf.mxu0
    %v1321 = vadd.f32 0.0, %v1320
    %v1322 = vpop.f32.mrf.mxu0
    %1323 = vmatprep.mubr.f32.mxu0 0.0
    %1324 = vmatmul.mubr.f32.gmra.mxu0 %v1146
    %v1325 = vpop.f32.mrf.mxu0
    %v1326 = vadd.f32 0.0, %v1325
    %v1327 = vpop.f32.mrf.mxu0
    %1328 = vmatprep.mubr.f32.mxu0 0.0
    %1329 = vmatmul.mubr.f32.gmra.mxu0 %v1149
    %v1330 = vpop.f32.mrf.mxu0
    %v1331 = vadd.f32 0.0, %v1330
    %v1332 = vpop.f32.mrf.mxu0
    %1333 = vmatprep.mubr.f32.mxu0 0.0
    %1334 = vmatmul.mubr.f32.gmra.mxu0 %v1152
    %v1335 = vpop.f32.mrf.mxu0
    %v1336 = vadd.f32 0.0, %v1335
    %v1337 = vpop.f32.mrf.mxu0
    %1338 = vmatprep.mubr.f32.mxu0 0.0
    %1339 = vmatmul.mubr.f32.gmra.mxu0 %v1155
    %v1340 = vpop.f32.mrf.mxu0
    %v1341 = vadd.f32 0.0, %v1340
    %v1342 = vpop.f32.mrf.mxu0
    %1343 = vmatprep.mubr.f32.mxu0 0.0
    %1344 = vmatmul.mubr.f32.gmra.mxu0 %v1158
    %v1345 = vpop.f32.mrf.mxu0
    %v1346 = vadd.f32 0.0, %v1345
    %v1347 = vpop.f32.mrf.mxu0
    %1348 = vmatprep.mubr.f32.mxu0 0.0
    %1349 = vmatmul.mubr.f32.gmra.mxu0 %v1161
    %v1350 = vpop.f32.mrf.mxu0
    %v1351 = vadd.f32 0.0, %v1350
    %v1352 = vpop.f32.mrf.mxu0
    %1353 = vmatprep.mubr.f32.mxu0 0.0
    %1354 = vmatmul.mubr.f32.gmra.mxu0 %v1164
    %v1355 = vpop.f32.mrf.mxu0
    %v1356 = vadd.f32 0.0, %v1355
    %v1357 = vpop.f32.mrf.mxu0
    %1358 = vmatprep.mubr.f32.mxu0 0.0
    %1359 = vmatmul.mubr.f32.gmra.mxu0 %v1167
    %v1360 = vpop.f32.mrf.mxu0
    %v1361 = vadd.f32 0.0, %v1360
    %v1362 = vpop.f32.mrf.mxu0
    %1363 = vmatprep.mubr.f32.mxu0 0.0
    %1364 = vmatmul.mubr.f32.gmra.mxu0 %v1170
    %v1365 = vpop.f32.mrf.mxu0
    %v1366 = vadd.f32 0.0, %v1365
    %v1367 = vpop.f32.mrf.mxu0
    %1368 = vmatprep.mubr.f32.mxu0 0.0
    %1369 = vmatmul.mubr.f32.gmra.mxu0 %v1173
    %v1370 = vpop.f32.mrf.mxu0
    %v1371 = vadd.f32 0.0, %v1370
    %v1372 = vpop.f32.mrf.mxu0
    %1373 = vmatprep.mubr.f32.mxu0 0.0
    %1374 = vmatmul.mubr.f32.gmra.mxu0 %v1176
    %v1375 = vpop.f32.mrf.mxu0
    %v1376 = vadd.f32 0.0, %v1375
    %v1377 = vpop.f32.mrf.mxu0
    %1378 = vmatprep.mubr.f32.mxu0 0.0
    %1379 = vmatmul.mubr.f32.gmra.mxu0 %v1179
    %v1380 = vpop.f32.mrf.mxu0
    %v1381 = vadd.f32 0.0, %v1380
    %v1382 = vpop.f32.mrf.mxu0
    %1383 = vmatprep.mubr.f32.mxu0 0.0
    %1384 = vmatmul.mubr.f32.gmra.mxu0 %v1182
    %v1385 = vpop.f32.mrf.mxu0
    %v1386 = vadd.f32 0.0, %v1385
    %v1387 = vpop.f32.mrf.mxu0
    %1388 = vmatprep.mubr.f32.mxu0 0.0
    %1389 = vmatmul.mubr.f32.gmra.mxu0 %v1185
    %v1390 = vpop.f32.mrf.mxu0
    %v1391 = vadd.f32 0.0, %v1390
    %v1392 = vpop.f32.mrf.mxu0
    %1393 = vmatprep.mubr.f32.mxu0 0.0
    %1394 = vmatmul.mubr.f32.gmra.mxu0 %v1188
    %v1395 = vpop.f32.mrf.mxu0
    %v1396 = vadd.f32 0.0, %v1395
    %v1397 = vpop.f32.mrf.mxu0
    %1398 = vmatprep.mubr.f32.mxu0 0.0
    %1399 = vmatmul.mubr.f32.gmra.mxu0 %v1191
    %v1400 = vpop.f32.mrf.mxu0
    %v1401 = vadd.f32 0.0, %v1400
    %v1402 = vpop.f32.mrf.mxu0
    %1403 = vmatprep.mubr.f32.mxu0 0.0
    %1404 = vmatmul.mubr.f32.gmra.mxu0 %v1194
    %v1405 = vpop.f32.mrf.mxu0
    %v1406 = vadd.f32 0.0, %v1405
    %v1407 = vpop.f32.mrf.mxu0
    %1408 = vmatprep.mubr.f32.mxu0 0.0
    %1409 = vmatmul.mubr.f32.gmra.mxu0 %v1197
    %v1410 = vpop.f32.mrf.mxu0
    %v1411 = vadd.f32 0.0, %v1410
    %v1412 = vpop.f32.mrf.mxu0
    %1413 = vmatprep.mubr.f32.mxu0 0.0
    %1414 = vmatmul.mubr.f32.gmra.mxu0 %v1200
    %v1415 = vpop.f32.mrf.mxu0
    %v1416 = vadd.f32 0.0, %v1415
    %v1417 = vpop.f32.mrf.mxu0
    %1418 = vmatprep.mubr.f32.mxu0 0.0
    %1419 = vmatmul.mubr.f32.gmra.mxu0 %v1203
    %v1420 = vpop.f32.mrf.mxu0
    %v1421 = vadd.f32 0.0, %v1420
    %v1422 = vpop.f32.mrf.mxu0
    %1423 = vmatprep.mubr.f32.mxu0 0.0
    %1424 = vmatmul.mubr.f32.gmra.mxu0 %v1206
    %v1425 = vpop.f32.mrf.mxu0
    %v1426 = vadd.f32 0.0, %v1425
    %v1427 = vpop.f32.mrf.mxu0
    %1428 = vmatprep.mubr.f32.mxu0 0.0
    %1429 = vmatmul.mubr.f32.gmra.mxu0 %v1209
    %v1430 = vpop.f32.mrf.mxu0
    %v1431 = vadd.f32 0.0, %v1430
    %v1432 = vpop.f32.mrf.mxu0
    %1433 = vmatprep.mubr.f32.mxu0 0.0
    %1434 = vmatmul.mubr.f32.gmra.mxu0 %v1212
    %v1435 = vpop.f32.mrf.mxu0
    %v1436 = vadd.f32 0.0, %v1435
    %v1437 = vpop.f32.mrf.mxu0
    %1438 = vdwg.mxu0
    %v1439 = vsel %vm70, %v1281, -inf
    %v1440 = vrot.slane %v1439, 4
    %v1441 = vmax.f32 %v1439, %v1440
    %v1442 = vrot.slane %v1441, 2
    %v1443 = vmax.f32 %v1441, %v1442
    %v1444 = vrot.slane %v1443, 1
    %v1445 = vmax.f32 %v1443, %v1444
    %v1446 = vsel %vm70, %v1286, -inf
    %v1447 = vrot.slane %v1446, 4
    %v1448 = vmax.f32 %v1446, %v1447
    %v1449 = vrot.slane %v1448, 2
    %v1450 = vmax.f32 %v1448, %v1449
    %v1451 = vrot.slane %v1450, 1
    %v1452 = vmax.f32 %v1450, %v1451
    %v1453 = vsel %vm70, %v1291, -inf
    %v1454 = vrot.slane %v1453, 4
    %v1455 = vmax.f32 %v1453, %v1454
    %v1456 = vrot.slane %v1455, 2
    %v1457 = vmax.f32 %v1455, %v1456
    %v1458 = vrot.slane %v1457, 1
    %v1459 = vmax.f32 %v1457, %v1458
    %v1460 = vsel %vm70, %v1296, -inf
    %v1461 = vrot.slane %v1460, 4
    %v1462 = vmax.f32 %v1460, %v1461
    %v1463 = vrot.slane %v1462, 2
    %v1464 = vmax.f32 %v1462, %v1463
    %v1465 = vrot.slane %v1464, 1
    %v1466 = vmax.f32 %v1464, %v1465
    %v1467 = vsel %vm70, %v1301, -inf
    %v1468 = vrot.slane %v1467, 4
    %v1469 = vmax.f32 %v1467, %v1468
    %v1470 = vrot.slane %v1469, 2
    %v1471 = vmax.f32 %v1469, %v1470
    %v1472 = vrot.slane %v1471, 1
    %v1473 = vmax.f32 %v1471, %v1472
    %v1474 = vsel %vm70, %v1306, -inf
    %v1475 = vrot.slane %v1474, 4
    %v1476 = vmax.f32 %v1474, %v1475
    %v1477 = vrot.slane %v1476, 2
    %v1478 = vmax.f32 %v1476, %v1477
    %v1479 = vrot.slane %v1478, 1
    %v1480 = vmax.f32 %v1478, %v1479
    %v1481 = vsel %vm70, %v1311, -inf
    %v1482 = vrot.slane %v1481, 4
    %v1483 = vmax.f32 %v1481, %v1482
    %v1484 = vrot.slane %v1483, 2
    %v1485 = vmax.f32 %v1483, %v1484
    %v1486 = vrot.slane %v1485, 1
    %v1487 = vmax.f32 %v1485, %v1486
    %v1488 = vsel %vm70, %v1316, -inf
    %v1489 = vrot.slane %v1488, 4
    %v1490 = vmax.f32 %v1488, %v1489
    %v1491 = vrot.slane %v1490, 2
    %v1492 = vmax.f32 %v1490, %v1491
    %v1493 = vrot.slane %v1492, 1
    %v1494 = vmax.f32 %v1492, %v1493
    %v1495 = vsel %vm70, %v1321, -inf
    %v1496 = vrot.slane %v1495, 4
    %v1497 = vmax.f32 %v1495, %v1496
    %v1498 = vrot.slane %v1497, 2
    %v1499 = vmax.f32 %v1497, %v1498
    %v1500 = vrot.slane %v1499, 1
    %v1501 = vmax.f32 %v1499, %v1500
    %v1502 = vsel %vm70, %v1326, -inf
    %v1503 = vrot.slane %v1502, 4
    %v1504 = vmax.f32 %v1502, %v1503
    %v1505 = vrot.slane %v1504, 2
    %v1506 = vmax.f32 %v1504, %v1505
    %v1507 = vrot.slane %v1506, 1
    %v1508 = vmax.f32 %v1506, %v1507
    %v1509 = vsel %vm70, %v1331, -inf
    %v1510 = vrot.slane %v1509, 4
    %v1511 = vmax.f32 %v1509, %v1510
    %v1512 = vrot.slane %v1511, 2
    %v1513 = vmax.f32 %v1511, %v1512
    %v1514 = vrot.slane %v1513, 1
    %v1515 = vmax.f32 %v1513, %v1514
    %v1516 = vsel %vm70, %v1336, -inf
    %v1517 = vrot.slane %v1516, 4
    %v1518 = vmax.f32 %v1516, %v1517
    %v1519 = vrot.slane %v1518, 2
    %v1520 = vmax.f32 %v1518, %v1519
    %v1521 = vrot.slane %v1520, 1
    %v1522 = vmax.f32 %v1520, %v1521
    %v1523 = vsel %vm70, %v1341, -inf
    %v1524 = vrot.slane %v1523, 4
    %v1525 = vmax.f32 %v1523, %v1524
    %v1526 = vrot.slane %v1525, 2
    %v1527 = vmax.f32 %v1525, %v1526
    %v1528 = vrot.slane %v1527, 1
    %v1529 = vmax.f32 %v1527, %v1528
    %v1530 = vsel %vm70, %v1346, -inf
    %v1531 = vrot.slane %v1530, 4
    %v1532 = vmax.f32 %v1530, %v1531
    %v1533 = vrot.slane %v1532, 2
    %v1534 = vmax.f32 %v1532, %v1533
    %v1535 = vrot.slane %v1534, 1
    %v1536 = vmax.f32 %v1534, %v1535
    %v1537 = vsel %vm70, %v1351, -inf
    %v1538 = vrot.slane %v1537, 4
    %v1539 = vmax.f32 %v1537, %v1538
    %v1540 = vrot.slane %v1539, 2
    %v1541 = vmax.f32 %v1539, %v1540
    %v1542 = vrot.slane %v1541, 1
    %v1543 = vmax.f32 %v1541, %v1542
    %v1544 = vsel %vm70, %v1356, -inf
    %v1545 = vrot.slane %v1544, 4
    %v1546 = vmax.f32 %v1544, %v1545
    %v1547 = vrot.slane %v1546, 2
    %v1548 = vmax.f32 %v1546, %v1547
    %v1549 = vrot.slane %v1548, 1
    %v1550 = vmax.f32 %v1548, %v1549
    %v1551 = vsel %vm70, %v1361, -inf
    %v1552 = vrot.slane %v1551, 4
    %v1553 = vmax.f32 %v1551, %v1552
    %v1554 = vrot.slane %v1553, 2
    %v1555 = vmax.f32 %v1553, %v1554
    %v1556 = vrot.slane %v1555, 1
    %v1557 = vmax.f32 %v1555, %v1556
    %v1558 = vsel %vm70, %v1366, -inf
    %v1559 = vrot.slane %v1558, 4
    %v1560 = vmax.f32 %v1558, %v1559
    %v1561 = vrot.slane %v1560, 2
    %v1562 = vmax.f32 %v1560, %v1561
    %v1563 = vrot.slane %v1562, 1
    %v1564 = vmax.f32 %v1562, %v1563
    %v1565 = vsel %vm70, %v1371, -inf
    %v1566 = vrot.slane %v1565, 4
    %v1567 = vmax.f32 %v1565, %v1566
    %v1568 = vrot.slane %v1567, 2
    %v1569 = vmax.f32 %v1567, %v1568
    %v1570 = vrot.slane %v1569, 1
    %v1571 = vmax.f32 %v1569, %v1570
    %v1572 = vsel %vm70, %v1376, -inf
    %v1573 = vrot.slane %v1572, 4
    %v1574 = vmax.f32 %v1572, %v1573
    %v1575 = vrot.slane %v1574, 2
    %v1576 = vmax.f32 %v1574, %v1575
    %v1577 = vrot.slane %v1576, 1
    %v1578 = vmax.f32 %v1576, %v1577
    %v1579 = vsel %vm70, %v1381, -inf
    %v1580 = vrot.slane %v1579, 4
    %v1581 = vmax.f32 %v1579, %v1580
    %v1582 = vrot.slane %v1581, 2
    %v1583 = vmax.f32 %v1581, %v1582
    %v1584 = vrot.slane %v1583, 1
    %v1585 = vmax.f32 %v1583, %v1584
    %v1586 = vsel %vm70, %v1386, -inf
    %v1587 = vrot.slane %v1586, 4
    %v1588 = vmax.f32 %v1586, %v1587
    %v1589 = vrot.slane %v1588, 2
    %v1590 = vmax.f32 %v1588, %v1589
    %v1591 = vrot.slane %v1590, 1
    %v1592 = vmax.f32 %v1590, %v1591
    %v1593 = vsel %vm70, %v1391, -inf
    %v1594 = vrot.slane %v1593, 4
    %v1595 = vmax.f32 %v1593, %v1594
    %v1596 = vrot.slane %v1595, 2
    %v1597 = vmax.f32 %v1595, %v1596
    %v1598 = vrot.slane %v1597, 1
    %v1599 = vmax.f32 %v1597, %v1598
    %v1600 = vsel %vm70, %v1396, -inf
    %v1601 = vrot.slane %v1600, 4
    %v1602 = vmax.f32 %v1600, %v1601
    %v1603 = vrot.slane %v1602, 2
    %v1604 = vmax.f32 %v1602, %v1603
    %v1605 = vrot.slane %v1604, 1
    %v1606 = vmax.f32 %v1604, %v1605
    %v1607 = vsel %vm70, %v1401, -inf
    %v1608 = vrot.slane %v1607, 4
    %v1609 = vmax.f32 %v1607, %v1608
    %v1610 = vrot.slane %v1609, 2
    %v1611 = vmax.f32 %v1609, %v1610
    %v1612 = vrot.slane %v1611, 1
    %v1613 = vmax.f32 %v1611, %v1612
    %v1614 = vsel %vm70, %v1406, -inf
    %v1615 = vrot.slane %v1614, 4
    %v1616 = vmax.f32 %v1614, %v1615
    %v1617 = vrot.slane %v1616, 2
    %v1618 = vmax.f32 %v1616, %v1617
    %v1619 = vrot.slane %v1618, 1
    %v1620 = vmax.f32 %v1618, %v1619
    %v1621 = vsel %vm70, %v1411, -inf
    %v1622 = vrot.slane %v1621, 4
    %v1623 = vmax.f32 %v1621, %v1622
    %v1624 = vrot.slane %v1623, 2
    %v1625 = vmax.f32 %v1623, %v1624
    %v1626 = vrot.slane %v1625, 1
    %v1627 = vmax.f32 %v1625, %v1626
    %v1628 = vsel %vm70, %v1416, -inf
    %v1629 = vrot.slane %v1628, 4
    %v1630 = vmax.f32 %v1628, %v1629
    %v1631 = vrot.slane %v1630, 2
    %v1632 = vmax.f32 %v1630, %v1631
    %v1633 = vrot.slane %v1632, 1
    %v1634 = vmax.f32 %v1632, %v1633
    %v1635 = vsel %vm70, %v1421, -inf
    %v1636 = vrot.slane %v1635, 4
    %v1637 = vmax.f32 %v1635, %v1636
    %v1638 = vrot.slane %v1637, 2
    %v1639 = vmax.f32 %v1637, %v1638
    %v1640 = vrot.slane %v1639, 1
    %v1641 = vmax.f32 %v1639, %v1640
    %v1642 = vsel %vm70, %v1426, -inf
    %v1643 = vrot.slane %v1642, 4
    %v1644 = vmax.f32 %v1642, %v1643
    %v1645 = vrot.slane %v1644, 2
    %v1646 = vmax.f32 %v1644, %v1645
    %v1647 = vrot.slane %v1646, 1
    %v1648 = vmax.f32 %v1646, %v1647
    %v1649 = vsel %vm70, %v1431, -inf
    %v1650 = vrot.slane %v1649, 4
    %v1651 = vmax.f32 %v1649, %v1650
    %v1652 = vrot.slane %v1651, 2
    %v1653 = vmax.f32 %v1651, %v1652
    %v1654 = vrot.slane %v1653, 1
    %v1655 = vmax.f32 %v1653, %v1654
    %v1656 = vsel %vm70, %v1436, -inf
    %v1657 = vrot.slane %v1656, 4
    %v1658 = vmax.f32 %v1656, %v1657
    %v1659 = vrot.slane %v1658, 2
    %v1660 = vmax.f32 %v1658, %v1659
    %v1661 = vrot.slane %v1660, 1
    %v1662 = vmax.f32 %v1660, %v1661
    %v1663 = vsub.f32 %v1281, %v1445
    %v1664 = vsub.f32 %v1286, %v1452
    %v1665 = vsub.f32 %v1291, %v1459
    %v1666 = vsub.f32 %v1296, %v1466
    %v1667 = vsub.f32 %v1301, %v1473
    %v1668 = vsub.f32 %v1306, %v1480
    %v1669 = vsub.f32 %v1311, %v1487
    %v1670 = vsub.f32 %v1316, %v1494
    %v1671 = vsub.f32 %v1321, %v1501
    %v1672 = vsub.f32 %v1326, %v1508
    %v1673 = vsub.f32 %v1331, %v1515
    %v1674 = vsub.f32 %v1336, %v1522
    %v1675 = vsub.f32 %v1341, %v1529
    %v1676 = vsub.f32 %v1346, %v1536
    %v1677 = vsub.f32 %v1351, %v1543
    %v1678 = vsub.f32 %v1356, %v1550
    %v1679 = vsub.f32 %v1361, %v1557
    %v1680 = vsub.f32 %v1366, %v1564
    %v1681 = vsub.f32 %v1371, %v1571
    %v1682 = vsub.f32 %v1376, %v1578
    %v1683 = vsub.f32 %v1381, %v1585
    %v1684 = vsub.f32 %v1386, %v1592
    %v1685 = vsub.f32 %v1391, %v1599
    %v1686 = vsub.f32 %v1396, %v1606
    %v1687 = vsub.f32 %v1401, %v1613
    %v1688 = vsub.f32 %v1406, %v1620
    %v1689 = vsub.f32 %v1411, %v1627
    %v1690 = vsub.f32 %v1416, %v1634
    %v1691 = vsub.f32 %v1421, %v1641
    %v1692 = vsub.f32 %v1426, %v1648
    %v1693 = vsub.f32 %v1431, %v1655
    %v1694 = vsub.f32 %v1436, %v1662
    %v1695 = vmul.f32 %v1663, 1.442695
    %v1696 = vpow.pop %v1695
    %v1697 = vmul.f32 %v1664, 1.442695
    %v1698 = vpow.pop %v1697
    %v1699 = vmul.f32 %v1665, 1.442695
    %v1700 = vpow.pop %v1699
    %v1701 = vmul.f32 %v1666, 1.442695
    %v1702 = vpow.pop %v1701
    %v1703 = vmul.f32 %v1667, 1.442695
    %v1704 = vpow.pop %v1703
    %v1705 = vmul.f32 %v1668, 1.442695
    %v1706 = vpow.pop %v1705
    %v1707 = vmul.f32 %v1669, 1.442695
    %v1708 = vpow.pop %v1707
    %v1709 = vmul.f32 %v1670, 1.442695
    %v1710 = vpow.pop %v1709
    %v1711 = vmul.f32 %v1671, 1.442695
    %v1712 = vpow.pop %v1711
    %v1713 = vmul.f32 %v1672, 1.442695
    %v1714 = vpow.pop %v1713
    %v1715 = vmul.f32 %v1673, 1.442695
    %v1716 = vpow.pop %v1715
    %v1717 = vmul.f32 %v1674, 1.442695
    %v1718 = vpow.pop %v1717
    %v1719 = vmul.f32 %v1675, 1.442695
    %v1720 = vpow.pop %v1719
    %v1721 = vmul.f32 %v1676, 1.442695
    %v1722 = vpow.pop %v1721
    %v1723 = vmul.f32 %v1677, 1.442695
    %v1724 = vpow.pop %v1723
    %v1725 = vmul.f32 %v1678, 1.442695
    %v1726 = vpow.pop %v1725
    %v1727 = vmul.f32 %v1679, 1.442695
    %v1728 = vpow.pop %v1727
    %v1729 = vmul.f32 %v1680, 1.442695
    %v1730 = vpow.pop %v1729
    %v1731 = vmul.f32 %v1681, 1.442695
    %v1732 = vpow.pop %v1731
    %v1733 = vmul.f32 %v1682, 1.442695
    %v1734 = vpow.pop %v1733
    %v1735 = vmul.f32 %v1683, 1.442695
    %v1736 = vpow.pop %v1735
    %v1737 = vmul.f32 %v1684, 1.442695
    %v1738 = vpow.pop %v1737
    %v1739 = vmul.f32 %v1685, 1.442695
    %v1740 = vpow.pop %v1739
    %v1741 = vmul.f32 %v1686, 1.442695
    %v1742 = vpow.pop %v1741
    %v1743 = vmul.f32 %v1687, 1.442695
    %v1744 = vpow.pop %v1743
    %v1745 = vmul.f32 %v1688, 1.442695
    %v1746 = vpow.pop %v1745
    %v1747 = vmul.f32 %v1689, 1.442695
    %v1748 = vpow.pop %v1747
    %v1749 = vmul.f32 %v1690, 1.442695
    %v1750 = vpow.pop %v1749
    %v1751 = vmul.f32 %v1691, 1.442695
    %v1752 = vpow.pop %v1751
    %v1753 = vmul.f32 %v1692, 1.442695
    %v1754 = vpow.pop %v1753
    %v1755 = vmul.f32 %v1693, 1.442695
    %v1756 = vpow.pop %v1755
    %v1757 = vmul.f32 %v1694, 1.442695
    %v1758 = vpow.pop %v1757
    %v1759 = vsel %vm70, %v1696, 0.0
    %v1760 = vrot.slane %v1759, 4
    %v1761 = vadd.f32 %v1759, %v1760
    %v1762 = vrot.slane %v1761, 2
    %v1763 = vadd.f32 %v1761, %v1762
    %v1764 = vrot.slane %v1763, 1
    %v1765 = vadd.f32 %v1763, %v1764
    %v1766 = vsel %vm70, %v1698, 0.0
    %v1767 = vrot.slane %v1766, 4
    %v1768 = vadd.f32 %v1766, %v1767
    %v1769 = vrot.slane %v1768, 2
    %v1770 = vadd.f32 %v1768, %v1769
    %v1771 = vrot.slane %v1770, 1
    %v1772 = vadd.f32 %v1770, %v1771
    %v1773 = vsel %vm70, %v1700, 0.0
    %v1774 = vrot.slane %v1773, 4
    %v1775 = vadd.f32 %v1773, %v1774
    %v1776 = vrot.slane %v1775, 2
    %v1777 = vadd.f32 %v1775, %v1776
    %v1778 = vrot.slane %v1777, 1
    %v1779 = vadd.f32 %v1777, %v1778
    %v1780 = vsel %vm70, %v1702, 0.0
    %v1781 = vrot.slane %v1780, 4
    %v1782 = vadd.f32 %v1780, %v1781
    %v1783 = vrot.slane %v1782, 2
    %v1784 = vadd.f32 %v1782, %v1783
    %v1785 = vrot.slane %v1784, 1
    %v1786 = vadd.f32 %v1784, %v1785
    %v1787 = vsel %vm70, %v1704, 0.0
    %v1788 = vrot.slane %v1787, 4
    %v1789 = vadd.f32 %v1787, %v1788
    %v1790 = vrot.slane %v1789, 2
    %v1791 = vadd.f32 %v1789, %v1790
    %v1792 = vrot.slane %v1791, 1
    %v1793 = vadd.f32 %v1791, %v1792
    %v1794 = vsel %vm70, %v1706, 0.0
    %v1795 = vrot.slane %v1794, 4
    %v1796 = vadd.f32 %v1794, %v1795
    %v1797 = vrot.slane %v1796, 2
    %v1798 = vadd.f32 %v1796, %v1797
    %v1799 = vrot.slane %v1798, 1
    %v1800 = vadd.f32 %v1798, %v1799
    %v1801 = vsel %vm70, %v1708, 0.0
    %v1802 = vrot.slane %v1801, 4
    %v1803 = vadd.f32 %v1801, %v1802
    %v1804 = vrot.slane %v1803, 2
    %v1805 = vadd.f32 %v1803, %v1804
    %v1806 = vrot.slane %v1805, 1
    %v1807 = vadd.f32 %v1805, %v1806
    %v1808 = vsel %vm70, %v1710, 0.0
    %v1809 = vrot.slane %v1808, 4
    %v1810 = vadd.f32 %v1808, %v1809
    %v1811 = vrot.slane %v1810, 2
    %v1812 = vadd.f32 %v1810, %v1811
    %v1813 = vrot.slane %v1812, 1
    %v1814 = vadd.f32 %v1812, %v1813
    %v1815 = vsel %vm70, %v1712, 0.0
    %v1816 = vrot.slane %v1815, 4
    %v1817 = vadd.f32 %v1815, %v1816
    %v1818 = vrot.slane %v1817, 2
    %v1819 = vadd.f32 %v1817, %v1818
    %v1820 = vrot.slane %v1819, 1
    %v1821 = vadd.f32 %v1819, %v1820
    %v1822 = vsel %vm70, %v1714, 0.0
    %v1823 = vrot.slane %v1822, 4
    %v1824 = vadd.f32 %v1822, %v1823
    %v1825 = vrot.slane %v1824, 2
    %v1826 = vadd.f32 %v1824, %v1825
    %v1827 = vrot.slane %v1826, 1
    %v1828 = vadd.f32 %v1826, %v1827
    %v1829 = vsel %vm70, %v1716, 0.0
    %v1830 = vrot.slane %v1829, 4
    %v1831 = vadd.f32 %v1829, %v1830
    %v1832 = vrot.slane %v1831, 2
    %v1833 = vadd.f32 %v1831, %v1832
    %v1834 = vrot.slane %v1833, 1
    %v1835 = vadd.f32 %v1833, %v1834
    %v1836 = vsel %vm70, %v1718, 0.0
    %v1837 = vrot.slane %v1836, 4
    %v1838 = vadd.f32 %v1836, %v1837
    %v1839 = vrot.slane %v1838, 2
    %v1840 = vadd.f32 %v1838, %v1839
    %v1841 = vrot.slane %v1840, 1
    %v1842 = vadd.f32 %v1840, %v1841
    %v1843 = vsel %vm70, %v1720, 0.0
    %v1844 = vrot.slane %v1843, 4
    %v1845 = vadd.f32 %v1843, %v1844
    %v1846 = vrot.slane %v1845, 2
    %v1847 = vadd.f32 %v1845, %v1846
    %v1848 = vrot.slane %v1847, 1
    %v1849 = vadd.f32 %v1847, %v1848
    %v1850 = vsel %vm70, %v1722, 0.0
    %v1851 = vrot.slane %v1850, 4
    %v1852 = vadd.f32 %v1850, %v1851
    %v1853 = vrot.slane %v1852, 2
    %v1854 = vadd.f32 %v1852, %v1853
    %v1855 = vrot.slane %v1854, 1
    %v1856 = vadd.f32 %v1854, %v1855
    %v1857 = vsel %vm70, %v1724, 0.0
    %v1858 = vrot.slane %v1857, 4
    %v1859 = vadd.f32 %v1857, %v1858
    %v1860 = vrot.slane %v1859, 2
    %v1861 = vadd.f32 %v1859, %v1860
    %v1862 = vrot.slane %v1861, 1
    %v1863 = vadd.f32 %v1861, %v1862
    %v1864 = vsel %vm70, %v1726, 0.0
    %v1865 = vrot.slane %v1864, 4
    %v1866 = vadd.f32 %v1864, %v1865
    %v1867 = vrot.slane %v1866, 2
    %v1868 = vadd.f32 %v1866, %v1867
    %v1869 = vrot.slane %v1868, 1
    %v1870 = vadd.f32 %v1868, %v1869
    %v1871 = vsel %vm70, %v1728, 0.0
    %v1872 = vrot.slane %v1871, 4
    %v1873 = vadd.f32 %v1871, %v1872
    %v1874 = vrot.slane %v1873, 2
    %v1875 = vadd.f32 %v1873, %v1874
    %v1876 = vrot.slane %v1875, 1
    %v1877 = vadd.f32 %v1875, %v1876
    %v1878 = vsel %vm70, %v1730, 0.0
    %v1879 = vrot.slane %v1878, 4
    %v1880 = vadd.f32 %v1878, %v1879
    %v1881 = vrot.slane %v1880, 2
    %v1882 = vadd.f32 %v1880, %v1881
    %v1883 = vrot.slane %v1882, 1
    %v1884 = vadd.f32 %v1882, %v1883
    %v1885 = vsel %vm70, %v1732, 0.0
    %v1886 = vrot.slane %v1885, 4
    %v1887 = vadd.f32 %v1885, %v1886
    %v1888 = vrot.slane %v1887, 2
    %v1889 = vadd.f32 %v1887, %v1888
    %v1890 = vrot.slane %v1889, 1
    %v1891 = vadd.f32 %v1889, %v1890
    %v1892 = vsel %vm70, %v1734, 0.0
    %v1893 = vrot.slane %v1892, 4
    %v1894 = vadd.f32 %v1892, %v1893
    %v1895 = vrot.slane %v1894, 2
    %v1896 = vadd.f32 %v1894, %v1895
    %v1897 = vrot.slane %v1896, 1
    %v1898 = vadd.f32 %v1896, %v1897
    %v1899 = vsel %vm70, %v1736, 0.0
    %v1900 = vrot.slane %v1899, 4
    %v1901 = vadd.f32 %v1899, %v1900
    %v1902 = vrot.slane %v1901, 2
    %v1903 = vadd.f32 %v1901, %v1902
    %v1904 = vrot.slane %v1903, 1
    %v1905 = vadd.f32 %v1903, %v1904
    %v1906 = vsel %vm70, %v1738, 0.0
    %v1907 = vrot.slane %v1906, 4
    %v1908 = vadd.f32 %v1906, %v1907
    %v1909 = vrot.slane %v1908, 2
    %v1910 = vadd.f32 %v1908, %v1909
    %v1911 = vrot.slane %v1910, 1
    %v1912 = vadd.f32 %v1910, %v1911
    %v1913 = vsel %vm70, %v1740, 0.0
    %v1914 = vrot.slane %v1913, 4
    %v1915 = vadd.f32 %v1913, %v1914
    %v1916 = vrot.slane %v1915, 2
    %v1917 = vadd.f32 %v1915, %v1916
    %v1918 = vrot.slane %v1917, 1
    %v1919 = vadd.f32 %v1917, %v1918
    %v1920 = vsel %vm70, %v1742, 0.0
    %v1921 = vrot.slane %v1920, 4
    %v1922 = vadd.f32 %v1920, %v1921
    %v1923 = vrot.slane %v1922, 2
    %v1924 = vadd.f32 %v1922, %v1923
    %v1925 = vrot.slane %v1924, 1
    %v1926 = vadd.f32 %v1924, %v1925
    %v1927 = vsel %vm70, %v1744, 0.0
    %v1928 = vrot.slane %v1927, 4
    %v1929 = vadd.f32 %v1927, %v1928
    %v1930 = vrot.slane %v1929, 2
    %v1931 = vadd.f32 %v1929, %v1930
    %v1932 = vrot.slane %v1931, 1
    %v1933 = vadd.f32 %v1931, %v1932
    %v1934 = vsel %vm70, %v1746, 0.0
    %v1935 = vrot.slane %v1934, 4
    %v1936 = vadd.f32 %v1934, %v1935
    %v1937 = vrot.slane %v1936, 2
    %v1938 = vadd.f32 %v1936, %v1937
    %v1939 = vrot.slane %v1938, 1
    %v1940 = vadd.f32 %v1938, %v1939
    %v1941 = vsel %vm70, %v1748, 0.0
    %v1942 = vrot.slane %v1941, 4
    %v1943 = vadd.f32 %v1941, %v1942
    %v1944 = vrot.slane %v1943, 2
    %v1945 = vadd.f32 %v1943, %v1944
    %v1946 = vrot.slane %v1945, 1
    %v1947 = vadd.f32 %v1945, %v1946
    %v1948 = vsel %vm70, %v1750, 0.0
    %v1949 = vrot.slane %v1948, 4
    %v1950 = vadd.f32 %v1948, %v1949
    %v1951 = vrot.slane %v1950, 2
    %v1952 = vadd.f32 %v1950, %v1951
    %v1953 = vrot.slane %v1952, 1
    %v1954 = vadd.f32 %v1952, %v1953
    %v1955 = vsel %vm70, %v1752, 0.0
    %v1956 = vrot.slane %v1955, 4
    %v1957 = vadd.f32 %v1955, %v1956
    %v1958 = vrot.slane %v1957, 2
    %v1959 = vadd.f32 %v1957, %v1958
    %v1960 = vrot.slane %v1959, 1
    %v1961 = vadd.f32 %v1959, %v1960
    %v1962 = vsel %vm70, %v1754, 0.0
    %v1963 = vrot.slane %v1962, 4
    %v1964 = vadd.f32 %v1962, %v1963
    %v1965 = vrot.slane %v1964, 2
    %v1966 = vadd.f32 %v1964, %v1965
    %v1967 = vrot.slane %v1966, 1
    %v1968 = vadd.f32 %v1966, %v1967
    %v1969 = vsel %vm70, %v1756, 0.0
    %v1970 = vrot.slane %v1969, 4
    %v1971 = vadd.f32 %v1969, %v1970
    %v1972 = vrot.slane %v1971, 2
    %v1973 = vadd.f32 %v1971, %v1972
    %v1974 = vrot.slane %v1973, 1
    %v1975 = vadd.f32 %v1973, %v1974
    %v1976 = vsel %vm70, %v1758, 0.0
    %v1977 = vrot.slane %v1976, 4
    %v1978 = vadd.f32 %v1976, %v1977
    %v1979 = vrot.slane %v1978, 2
    %v1980 = vadd.f32 %v1978, %v1979
    %v1981 = vrot.slane %v1980, 1
    %v1982 = vadd.f32 %v1980, %v1981
    %v1983 = vrcp.pop %v1765
    %v1984 = vrcp.pop %v1772
    %v1985 = vrcp.pop %v1779
    %v1986 = vrcp.pop %v1786
    %v1987 = vrcp.pop %v1793
    %v1988 = vrcp.pop %v1800
    %v1989 = vrcp.pop %v1807
    %v1990 = vrcp.pop %v1814
    %v1991 = vrcp.pop %v1821
    %v1992 = vrcp.pop %v1828
    %v1993 = vrcp.pop %v1835
    %v1994 = vrcp.pop %v1842
    %v1995 = vrcp.pop %v1849
    %v1996 = vrcp.pop %v1856
    %v1997 = vrcp.pop %v1863
    %v1998 = vrcp.pop %v1870
    %v1999 = vrcp.pop %v1877
    %v2000 = vrcp.pop %v1884
    %v2001 = vrcp.pop %v1891
    %v2002 = vrcp.pop %v1898
    %v2003 = vrcp.pop %v1905
    %v2004 = vrcp.pop %v1912
    %v2005 = vrcp.pop %v1919
    %v2006 = vrcp.pop %v1926
    %v2007 = vrcp.pop %v1933
    %v2008 = vrcp.pop %v1940
    %v2009 = vrcp.pop %v1947
    %v2010 = vrcp.pop %v1954
    %v2011 = vrcp.pop %v1961
    %v2012 = vrcp.pop %v1968
    %v2013 = vrcp.pop %v1975
    %v2014 = vrcp.pop %v1982
    %v2015 = vmul.f32 %v1696, %v1983
    %v2016 = vmul.f32 %v1698, %v1984
    %v2017 = vmul.f32 %v1700, %v1985
    %v2018 = vmul.f32 %v1702, %v1986
    %v2019 = vmul.f32 %v1704, %v1987
    %v2020 = vmul.f32 %v1706, %v1988
    %v2021 = vmul.f32 %v1708, %v1989
    %v2022 = vmul.f32 %v1710, %v1990
    %v2023 = vmul.f32 %v1712, %v1991
    %v2024 = vmul.f32 %v1714, %v1992
    %v2025 = vmul.f32 %v1716, %v1993
    %v2026 = vmul.f32 %v1718, %v1994
    %v2027 = vmul.f32 %v1720, %v1995
    %v2028 = vmul.f32 %v1722, %v1996
    %v2029 = vmul.f32 %v1724, %v1997
    %v2030 = vmul.f32 %v1726, %v1998
    %v2031 = vmul.f32 %v1728, %v1999
    %v2032 = vmul.f32 %v1730, %v2000
    %v2033 = vmul.f32 %v1732, %v2001
    %v2034 = vmul.f32 %v1734, %v2002
    %v2035 = vmul.f32 %v1736, %v2003
    %v2036 = vmul.f32 %v1738, %v2004
    %v2037 = vmul.f32 %v1740, %v2005
    %v2038 = vmul.f32 %v1742, %v2006
    %v2039 = vmul.f32 %v1744, %v2007
    %v2040 = vmul.f32 %v1746, %v2008
    %v2041 = vmul.f32 %v1748, %v2009
    %v2042 = vmul.f32 %v1750, %v2010
    %v2043 = vmul.f32 %v1752, %v2011
    %v2044 = vmul.f32 %v1754, %v2012
    %v2045 = vmul.f32 %v1756, %v2013
    %v2046 = vmul.f32 %v1758, %v2014
    %v2047 = vmul.f32 %v2015, %v564
    %v2048 = vmul.f32 %v2016, %v569
    %v2049 = vmul.f32 %v2017, %v574
    %v2050 = vmul.f32 %v2018, %v579
    %v2051 = vmul.f32 %v2019, %v584
    %v2052 = vmul.f32 %v2020, %v589
    %v2053 = vmul.f32 %v2021, %v594
    %v2054 = vmul.f32 %v2022, %v599
    %v2055 = vmul.f32 %v2023, %v604
    %v2056 = vmul.f32 %v2024, %v609
    %v2057 = vmul.f32 %v2025, %v614
    %v2058 = vmul.f32 %v2026, %v619
    %v2059 = vmul.f32 %v2027, %v624
    %v2060 = vmul.f32 %v2028, %v629
    %v2061 = vmul.f32 %v2029, %v634
    %v2062 = vmul.f32 %v2030, %v639
    %v2063 = vmul.f32 %v2031, %v644
    %v2064 = vmul.f32 %v2032, %v649
    %v2065 = vmul.f32 %v2033, %v654
    %v2066 = vmul.f32 %v2034, %v659
    %v2067 = vmul.f32 %v2035, %v664
    %v2068 = vmul.f32 %v2036, %v669
    %v2069 = vmul.f32 %v2037, %v674
    %v2070 = vmul.f32 %v2038, %v679
    %v2071 = vmul.f32 %v2039, %v684
    %v2072 = vmul.f32 %v2040, %v689
    %v2073 = vmul.f32 %v2041, %v694
    %v2074 = vmul.f32 %v2042, %v699
    %v2075 = vmul.f32 %v2043, %v704
    %v2076 = vmul.f32 %v2044, %v709
    %v2077 = vmul.f32 %v2045, %v714
    %v2078 = vmul.f32 %v2046, %v719
    %v2079 = vsel %vm70, %v2047, 0.0
    %v2080 = vrot.slane %v2079, 4
    %v2081 = vadd.f32 %v2079, %v2080
    %v2082 = vrot.slane %v2081, 2
    %v2083 = vadd.f32 %v2081, %v2082
    %v2084 = vrot.slane %v2083, 1
    %v2085 = vadd.f32 %v2083, %v2084
    %v2086 = vsel %vm70, %v2048, 0.0
    %v2087 = vrot.slane %v2086, 4
    %v2088 = vadd.f32 %v2086, %v2087
    %v2089 = vrot.slane %v2088, 2
    %v2090 = vadd.f32 %v2088, %v2089
    %v2091 = vrot.slane %v2090, 1
    %v2092 = vadd.f32 %v2090, %v2091
    %v2093 = vsel %vm70, %v2049, 0.0
    %v2094 = vrot.slane %v2093, 4
    %v2095 = vadd.f32 %v2093, %v2094
    %v2096 = vrot.slane %v2095, 2
    %v2097 = vadd.f32 %v2095, %v2096
    %v2098 = vrot.slane %v2097, 1
    %v2099 = vadd.f32 %v2097, %v2098
    %v2100 = vsel %vm70, %v2050, 0.0
    %v2101 = vrot.slane %v2100, 4
    %v2102 = vadd.f32 %v2100, %v2101
    %v2103 = vrot.slane %v2102, 2
    %v2104 = vadd.f32 %v2102, %v2103
    %v2105 = vrot.slane %v2104, 1
    %v2106 = vadd.f32 %v2104, %v2105
    %v2107 = vsel %vm70, %v2051, 0.0
    %v2108 = vrot.slane %v2107, 4
    %v2109 = vadd.f32 %v2107, %v2108
    %v2110 = vrot.slane %v2109, 2
    %v2111 = vadd.f32 %v2109, %v2110
    %v2112 = vrot.slane %v2111, 1
    %v2113 = vadd.f32 %v2111, %v2112
    %v2114 = vsel %vm70, %v2052, 0.0
    %v2115 = vrot.slane %v2114, 4
    %v2116 = vadd.f32 %v2114, %v2115
    %v2117 = vrot.slane %v2116, 2
    %v2118 = vadd.f32 %v2116, %v2117
    %v2119 = vrot.slane %v2118, 1
    %v2120 = vadd.f32 %v2118, %v2119
    %v2121 = vsel %vm70, %v2053, 0.0
    %v2122 = vrot.slane %v2121, 4
    %v2123 = vadd.f32 %v2121, %v2122
    %v2124 = vrot.slane %v2123, 2
    %v2125 = vadd.f32 %v2123, %v2124
    %v2126 = vrot.slane %v2125, 1
    %v2127 = vadd.f32 %v2125, %v2126
    %v2128 = vsel %vm70, %v2054, 0.0
    %v2129 = vrot.slane %v2128, 4
    %v2130 = vadd.f32 %v2128, %v2129
    %v2131 = vrot.slane %v2130, 2
    %v2132 = vadd.f32 %v2130, %v2131
    %v2133 = vrot.slane %v2132, 1
    %v2134 = vadd.f32 %v2132, %v2133
    %v2135 = vsel %vm70, %v2055, 0.0
    %v2136 = vrot.slane %v2135, 4
    %v2137 = vadd.f32 %v2135, %v2136
    %v2138 = vrot.slane %v2137, 2
    %v2139 = vadd.f32 %v2137, %v2138
    %v2140 = vrot.slane %v2139, 1
    %v2141 = vadd.f32 %v2139, %v2140
    %v2142 = vsel %vm70, %v2056, 0.0
    %v2143 = vrot.slane %v2142, 4
    %v2144 = vadd.f32 %v2142, %v2143
    %v2145 = vrot.slane %v2144, 2
    %v2146 = vadd.f32 %v2144, %v2145
    %v2147 = vrot.slane %v2146, 1
    %v2148 = vadd.f32 %v2146, %v2147
    %v2149 = vsel %vm70, %v2057, 0.0
    %v2150 = vrot.slane %v2149, 4
    %v2151 = vadd.f32 %v2149, %v2150
    %v2152 = vrot.slane %v2151, 2
    %v2153 = vadd.f32 %v2151, %v2152
    %v2154 = vrot.slane %v2153, 1
    %v2155 = vadd.f32 %v2153, %v2154
    %v2156 = vsel %vm70, %v2058, 0.0
    %v2157 = vrot.slane %v2156, 4
    %v2158 = vadd.f32 %v2156, %v2157
    %v2159 = vrot.slane %v2158, 2
    %v2160 = vadd.f32 %v2158, %v2159
    %v2161 = vrot.slane %v2160, 1
    %v2162 = vadd.f32 %v2160, %v2161
    %v2163 = vsel %vm70, %v2059, 0.0
    %v2164 = vrot.slane %v2163, 4
    %v2165 = vadd.f32 %v2163, %v2164
    %v2166 = vrot.slane %v2165, 2
    %v2167 = vadd.f32 %v2165, %v2166
    %v2168 = vrot.slane %v2167, 1
    %v2169 = vadd.f32 %v2167, %v2168
    %v2170 = vsel %vm70, %v2060, 0.0
    %v2171 = vrot.slane %v2170, 4
    %v2172 = vadd.f32 %v2170, %v2171
    %v2173 = vrot.slane %v2172, 2
    %v2174 = vadd.f32 %v2172, %v2173
    %v2175 = vrot.slane %v2174, 1
    %v2176 = vadd.f32 %v2174, %v2175
    %v2177 = vsel %vm70, %v2061, 0.0
    %v2178 = vrot.slane %v2177, 4
    %v2179 = vadd.f32 %v2177, %v2178
    %v2180 = vrot.slane %v2179, 2
    %v2181 = vadd.f32 %v2179, %v2180
    %v2182 = vrot.slane %v2181, 1
    %v2183 = vadd.f32 %v2181, %v2182
    %v2184 = vsel %vm70, %v2062, 0.0
    %v2185 = vrot.slane %v2184, 4
    %v2186 = vadd.f32 %v2184, %v2185
    %v2187 = vrot.slane %v2186, 2
    %v2188 = vadd.f32 %v2186, %v2187
    %v2189 = vrot.slane %v2188, 1
    %v2190 = vadd.f32 %v2188, %v2189
    %v2191 = vsel %vm70, %v2063, 0.0
    %v2192 = vrot.slane %v2191, 4
    %v2193 = vadd.f32 %v2191, %v2192
    %v2194 = vrot.slane %v2193, 2
    %v2195 = vadd.f32 %v2193, %v2194
    %v2196 = vrot.slane %v2195, 1
    %v2197 = vadd.f32 %v2195, %v2196
    %v2198 = vsel %vm70, %v2064, 0.0
    %v2199 = vrot.slane %v2198, 4
    %v2200 = vadd.f32 %v2198, %v2199
    %v2201 = vrot.slane %v2200, 2
    %v2202 = vadd.f32 %v2200, %v2201
    %v2203 = vrot.slane %v2202, 1
    %v2204 = vadd.f32 %v2202, %v2203
    %v2205 = vsel %vm70, %v2065, 0.0
    %v2206 = vrot.slane %v2205, 4
    %v2207 = vadd.f32 %v2205, %v2206
    %v2208 = vrot.slane %v2207, 2
    %v2209 = vadd.f32 %v2207, %v2208
    %v2210 = vrot.slane %v2209, 1
    %v2211 = vadd.f32 %v2209, %v2210
    %v2212 = vsel %vm70, %v2066, 0.0
    %v2213 = vrot.slane %v2212, 4
    %v2214 = vadd.f32 %v2212, %v2213
    %v2215 = vrot.slane %v2214, 2
    %v2216 = vadd.f32 %v2214, %v2215
    %v2217 = vrot.slane %v2216, 1
    %v2218 = vadd.f32 %v2216, %v2217
    %v2219 = vsel %vm70, %v2067, 0.0
    %v2220 = vrot.slane %v2219, 4
    %v2221 = vadd.f32 %v2219, %v2220
    %v2222 = vrot.slane %v2221, 2
    %v2223 = vadd.f32 %v2221, %v2222
    %v2224 = vrot.slane %v2223, 1
    %v2225 = vadd.f32 %v2223, %v2224
    %v2226 = vsel %vm70, %v2068, 0.0
    %v2227 = vrot.slane %v2226, 4
    %v2228 = vadd.f32 %v2226, %v2227
    %v2229 = vrot.slane %v2228, 2
    %v2230 = vadd.f32 %v2228, %v2229
    %v2231 = vrot.slane %v2230, 1
    %v2232 = vadd.f32 %v2230, %v2231
    %v2233 = vsel %vm70, %v2069, 0.0
    %v2234 = vrot.slane %v2233, 4
    %v2235 = vadd.f32 %v2233, %v2234
    %v2236 = vrot.slane %v2235, 2
    %v2237 = vadd.f32 %v2235, %v2236
    %v2238 = vrot.slane %v2237, 1
    %v2239 = vadd.f32 %v2237, %v2238
    %v2240 = vsel %vm70, %v2070, 0.0
    %v2241 = vrot.slane %v2240, 4
    %v2242 = vadd.f32 %v2240, %v2241
    %v2243 = vrot.slane %v2242, 2
    %v2244 = vadd.f32 %v2242, %v2243
    %v2245 = vrot.slane %v2244, 1
    %v2246 = vadd.f32 %v2244, %v2245
    %v2247 = vsel %vm70, %v2071, 0.0
    %v2248 = vrot.slane %v2247, 4
    %v2249 = vadd.f32 %v2247, %v2248
    %v2250 = vrot.slane %v2249, 2
    %v2251 = vadd.f32 %v2249, %v2250
    %v2252 = vrot.slane %v2251, 1
    %v2253 = vadd.f32 %v2251, %v2252
    %v2254 = vsel %vm70, %v2072, 0.0
    %v2255 = vrot.slane %v2254, 4
    %v2256 = vadd.f32 %v2254, %v2255
    %v2257 = vrot.slane %v2256, 2
    %v2258 = vadd.f32 %v2256, %v2257
    %v2259 = vrot.slane %v2258, 1
    %v2260 = vadd.f32 %v2258, %v2259
    %v2261 = vsel %vm70, %v2073, 0.0
    %v2262 = vrot.slane %v2261, 4
    %v2263 = vadd.f32 %v2261, %v2262
    %v2264 = vrot.slane %v2263, 2
    %v2265 = vadd.f32 %v2263, %v2264
    %v2266 = vrot.slane %v2265, 1
    %v2267 = vadd.f32 %v2265, %v2266
    %v2268 = vsel %vm70, %v2074, 0.0
    %v2269 = vrot.slane %v2268, 4
    %v2270 = vadd.f32 %v2268, %v2269
    %v2271 = vrot.slane %v2270, 2
    %v2272 = vadd.f32 %v2270, %v2271
    %v2273 = vrot.slane %v2272, 1
    %v2274 = vadd.f32 %v2272, %v2273
    %v2275 = vsel %vm70, %v2075, 0.0
    %v2276 = vrot.slane %v2275, 4
    %v2277 = vadd.f32 %v2275, %v2276
    %v2278 = vrot.slane %v2277, 2
    %v2279 = vadd.f32 %v2277, %v2278
    %v2280 = vrot.slane %v2279, 1
    %v2281 = vadd.f32 %v2279, %v2280
    %v2282 = vsel %vm70, %v2076, 0.0
    %v2283 = vrot.slane %v2282, 4
    %v2284 = vadd.f32 %v2282, %v2283
    %v2285 = vrot.slane %v2284, 2
    %v2286 = vadd.f32 %v2284, %v2285
    %v2287 = vrot.slane %v2286, 1
    %v2288 = vadd.f32 %v2286, %v2287
    %v2289 = vsel %vm70, %v2077, 0.0
    %v2290 = vrot.slane %v2289, 4
    %v2291 = vadd.f32 %v2289, %v2290
    %v2292 = vrot.slane %v2291, 2
    %v2293 = vadd.f32 %v2291, %v2292
    %v2294 = vrot.slane %v2293, 1
    %v2295 = vadd.f32 %v2293, %v2294
    %v2296 = vsel %vm70, %v2078, 0.0
    %v2297 = vrot.slane %v2296, 4
    %v2298 = vadd.f32 %v2296, %v2297
    %v2299 = vrot.slane %v2298, 2
    %v2300 = vadd.f32 %v2298, %v2299
    %v2301 = vrot.slane %v2300, 1
    %v2302 = vadd.f32 %v2300, %v2301
    %v2303 = vld [vmem:[%s5] sm:$0xff]
    %v2304 = vld [vmem:[%s5 + $0x8] sm:$0xff]
    %v2305 = vld [vmem:[%s5 + $0x10] sm:$0xff]
    %v2306 = vld [vmem:[%s5 + $0x18] sm:$0xff]
    %v2307 = vld [vmem:[%s6] sm:$0x1]
    %v2309 = vlaneseq
    %v2310 = vshrl.u32 %v2309, 7
    %v2311 = vsub.s32 0, %v2310
    %v2312 = vrot.slane %v2307, %v2311
    %vm2346 = vcmask 1041409
    %v2347 = vsel %vm2346, %v2092, %v2085
    %vm2348 = vcmask 1042434
    %v2349 = vsel %vm2348, %v2099, %v2347
    %vm2350 = vcmask 1043459
    %v2351 = vsel %vm2350, %v2106, %v2349
    %vm2352 = vcmask 1044484
    %v2353 = vsel %vm2352, %v2113, %v2351
    %vm2354 = vcmask 1045509
    %v2355 = vsel %vm2354, %v2120, %v2353
    %vm2356 = vcmask 1046534
    %v2357 = vsel %vm2356, %v2127, %v2355
    %vm2358 = vcmask 1047559
    %v2359 = vsel %vm2358, %v2134, %v2357
    %v2360 = vsel %vm2346, %v2148, %v2141
    %v2361 = vsel %vm2348, %v2155, %v2360
    %v2362 = vsel %vm2350, %v2162, %v2361
    %v2363 = vsel %vm2352, %v2169, %v2362
    %v2364 = vsel %vm2354, %v2176, %v2363
    %v2365 = vsel %vm2356, %v2183, %v2364
    %v2366 = vsel %vm2358, %v2190, %v2365
    %v2367 = vsel %vm2346, %v2204, %v2197
    %v2368 = vsel %vm2348, %v2211, %v2367
    %v2369 = vsel %vm2350, %v2218, %v2368
    %v2370 = vsel %vm2352, %v2225, %v2369
    %v2371 = vsel %vm2354, %v2232, %v2370
    %v2372 = vsel %vm2356, %v2239, %v2371
    %v2373 = vsel %vm2358, %v2246, %v2372
    %v2374 = vsel %vm2346, %v2260, %v2253
    %v2375 = vsel %vm2348, %v2267, %v2374
    %v2376 = vsel %vm2350, %v2274, %v2375
    %v2377 = vsel %vm2352, %v2281, %v2376
    %v2378 = vsel %vm2354, %v2288, %v2377
    %v2379 = vsel %vm2356, %v2295, %v2378
    %v2380 = vsel %vm2358, %v2302, %v2379
    %v2381 = vsel %vm70, %v2359, 0
    %v2383 = vsel %vm70, %v2366, 0
    %v2385 = vsel %vm70, %v2373, 0
    %v2387 = vsel %vm70, %v2380, 0
    %2389 = vmatprep.subr.mxu0 0.0
    %2390 = vmatpush1.msra.mxu0 0.0
    %2391 = vmatprep.subr.mxu0 0.0
    %2392 = vmatpush1.msra.mxu0 0.0
    %2393 = vmatprep.subr.mxu0 0.0
    %2394 = vmatpush1.msra.mxu0 0.0
    %2395 = vmatprep.subr.mxu0 0.0
    %2396 = vmatpush1.msra.mxu0 0.0
    %2397 = vmatprep.subr.mxu0 0.0
    %2398 = vmatpush1.msra.mxu0 0.0
    %2399 = vmatprep.subr.mxu0 0.0
    %2400 = vmatpush1.msra.mxu0 0.0
    %2401 = vmatprep.subr.mxu0 0.0
    %2402 = vmatpush1.msra.mxu0 0.0
    %2403 = vmatprep.subr.mxu0 0.0
    %2404 = vmatpush1.msra.mxu0 0.0
    %2405 = vmatprep.subr.mxu0 0.0
    %2406 = vmatpush1.msra.mxu0 0.0
    %2407 = vmatprep.subr.mxu0 0.0
    %2408 = vmatpush1.msra.mxu0 0.0
    %2409 = vmatprep.subr.mxu0 0.0
    %2410 = vmatpush1.msra.mxu0 0.0
    %2411 = vmatprep.subr.mxu0 0.0
    %2412 = vmatpush1.msra.mxu0 0.0
    %2413 = vmatprep.subr.mxu0 0.0
    %2414 = vmatpush1.msra.mxu0 %v2306
    %2415 = vmatprep.subr.mxu0 0.0
    %2416 = vmatpush1.msra.mxu0 %v2305
    %2417 = vmatprep.subr.mxu0 0.0
    %2418 = vmatpush1.msra.mxu0 %v2304
    %2419 = vmatprep.subr.mxu0 0.0
    %2420 = vmatpush1.msra.mxu0 %v2303
    %2421 = vmatprep.subr.mxu0 0.0
    %2422 = vmatpush2.msra.mxu0 0.0
    %2423 = vmatprep.subr.mxu0 0.0
    %2424 = vmatpush2.msra.mxu0 0.0
    %2425 = vmatprep.subr.mxu0 0.0
    %2426 = vmatpush2.msra.mxu0 0.0
    %2427 = vmatprep.subr.mxu0 0.0
    %2428 = vmatpush2.msra.mxu0 0.0
    %2429 = vmatprep.subr.mxu0 0.0
    %2430 = vmatpush2.msra.mxu0 0.0
    %2431 = vmatprep.subr.mxu0 0.0
    %2432 = vmatpush2.msra.mxu0 0.0
    %2433 = vmatprep.subr.mxu0 0.0
    %2434 = vmatpush2.msra.mxu0 0.0
    %2435 = vmatprep.subr.mxu0 0.0
    %2436 = vmatpush2.msra.mxu0 0.0
    %2437 = vmatprep.subr.mxu0 0.0
    %2438 = vmatpush2.msra.mxu0 0.0
    %2439 = vmatprep.subr.mxu0 0.0
    %2440 = vmatpush2.msra.mxu0 0.0
    %2441 = vmatprep.subr.mxu0 0.0
    %2442 = vmatpush2.msra.mxu0 0.0
    %2443 = vmatprep.subr.mxu0 0.0
    %2444 = vmatpush2.msra.mxu0 0.0
    %2445 = vmatprep.subr.mxu0 0.0
    %2446 = vmatpush2.msra.mxu0 0.0
    %2447 = vmatprep.subr.mxu0 0.0
    %2448 = vmatpush2.msra.mxu0 0.0
    %2449 = vmatprep.subr.mxu0 0.0
    %2450 = vmatpush2.msra.mxu0 0.0
    %2451 = vmatprep.subr.mxu0 0.0
    %2452 = vmatpush2.msra.mxu0 0.0
    %2453 = vmatprep.mubr.f32.mxu0 0.0
    %2454 = vmatmul.mubr.f32.gmra.mxu0 %v2381
    %v2455 = vpop.f32.mrf.mxu0
    %v2456 = vadd.f32 %v2312, %v2455
    %v2457 = vpop.f32.mrf.mxu0
    %2458 = vmatprep.mubr.f32.mxu0 0.0
    %2459 = vmatmul.mubr.f32.gmra.mxu0 %v2383
    %v2460 = vpop.f32.mrf.mxu0
    %v2461 = vadd.f32 %v2312, %v2460
    %v2462 = vpop.f32.mrf.mxu0
    %2463 = vmatprep.mubr.f32.mxu0 0.0
    %2464 = vmatmul.mubr.f32.gmra.mxu0 %v2385
    %v2465 = vpop.f32.mrf.mxu0
    %v2466 = vadd.f32 %v2312, %v2465
    %v2467 = vpop.f32.mrf.mxu0
    %2468 = vmatprep.mubr.f32.mxu0 0.0
    %2469 = vmatmul.mubr.f32.gmra.mxu0 %v2387
    %v2470 = vpop.f32.mrf.mxu0
    %v2471 = vadd.f32 %v2312, %v2470
    %v2472 = vpop.f32.mrf.mxu0
    %2473 = vdwg.mxu0
    %2474 = vst.msk [vmem:[#allocation2] sm:$0xff] %vm70, %v2456
    %2475 = vst.msk [vmem:[#allocation2 + $0x8] sm:$0xff] %vm70, %v2461
    %2476 = vst.msk [vmem:[#allocation2 + $0x10] sm:$0xff] %vm70, %v2466
    %2477 = vst.msk [vmem:[#allocation2 + $0x18] sm:$0xff] %vm70, %v2471
    // Predicated region
    $region34: #{tpu_custom_call.1} parent=1 // pred_check
      _
    $region35: #{tpu_custom_call.1} parent=1 // pred_check_branch
      %2479 = sbr.rel (0) target = $region37
    $region36: #{tpu_custom_call.1} parent=1 // pred_region
      %s2481 = ssub.s32 512, 512
      %2482 = vsyncadd [#allocation3], %s2481
      %s2483 = sshll.u32 [#allocation2], 4
      %s2484 = int_to_ptr.vmem [resolvable:$true] %s2483
      %2489 = dma.vmem_to_hbm [thread:$0]  %s2484, 512, %s8, [#allocation3], 128, 128, 8
    $region37: #{tpu_custom_call.1} parent=1 // pred_fallthru
      _
    // Predicated region
    $region38: #{tpu_custom_call.1} parent=1 // pred_check
      _
    $region39: #{tpu_custom_call.1} parent=1 // pred_check_branch
      %2491 = sbr.rel (0) target = $region41
    $region40: #{tpu_custom_call.1} parent=1 // pred_region
      %2492 = dma.done [#allocation3], 512
    $region41: #{tpu_custom_call.1} parent=1 // pred_fallthru
      _
    %2493 = vsyncpa [#allocation3], 1

</llo_original>
